<compile_context>
chip_gen: v6e
topology: v6e:2x2x1
jax: 0.10.0
libtpu: 0.0.40
codegen_flags: <defaults>
</compile_context>

<pallas_src>
import functools

import jax
import jax.numpy as jnp
from jax import lax
from jax.experimental import pallas as pl
from jax.experimental.pallas import tpu as pltpu


_MASK_VAL = -3.0e38   # additive mask for non-edges (representable in bf16)
_M_INIT = -1.0e30     # online-softmax running-max init; >> _MASK_VAL so fully-masked
                      # chunks contribute exactly 0 to the running sums


def _round_up(x, m):
    return ((x + m - 1) // m) * m


def _gat_stack_kernel(x_hbm, w_ref, avb_ref, adj_ref, o_ref,
                      xin, h_vmem, asrc, adst, m_run, d_run, acc, copy_sem,
                      *, num_layers, n_tiles, negative_slope, adj_resident):
    l = pl.program_id(0)        # layer             (sequential)
    r = pl.program_id(1)        # destination tile  (sequential)
    k = pl.program_id(2)        # source chunk      (sequential, online softmax)
    nk = pl.num_programs(2)

    # ---- per-layer prologue: h = x_l @ W_l and attention logits, streamed per node chunk ----
    @pl.when(jnp.logical_and(r == 0, k == 0))
    def _prologue():
        @pl.when(l == 0)
        def _seed():
            cp = pltpu.make_async_copy(x_hbm, xin, copy_sem)   # single DMA of layer-0 input
            cp.start()
            cp.wait()

        w = w_ref[0]                     # [f_pad, f_pad] bf16
        avb = avb_ref[0]                 # [8, f_pad] f32: rows = att_src, att_dst, bias
        att_s = avb[0:1, :]
        att_d = avb[1:2, :]

        def _h_chunk(c, carry):
            hq = jnp.dot(xin[c].astype(jnp.bfloat16), w,
                         preferred_element_type=jnp.float32)            # [tn, f_pad] f32 (MXU)
            adst[c] = jnp.sum(hq * att_d, axis=-1, keepdims=True)       # [tn, 1]
            asrc[c] = jnp.sum(hq * att_s, axis=-1, keepdims=True).T     # [1, tn] (chunk-local relayout)
            h_vmem[c] = hq.astype(jnp.bfloat16)
            return carry

        lax.fori_loop(0, n_tiles, _h_chunk, 0)

    # ---- online-softmax state init for this destination tile ----
    @pl.when(k == 0)
    def _init():
        m_run[...] = jnp.full(m_run.shape, _M_INIT, jnp.float32)
        d_run[...] = jnp.zeros(d_run.shape, jnp.float32)
        acc[...] = jnp.zeros(acc.shape, jnp.float32)

    # ---- one (dst tile, src chunk) attention block ----
    e = adst[r] + asrc[k]                                   # [tn, tn]
    e = jnp.where(e >= 0.0, e, negative_slope * e)          # LeakyReLU
    if adj_resident:
        bias_mask = adj_ref[0, r * n_tiles + k]             # VMEM-resident additive mask block
    else:
        bias_mask = adj_ref[0, 0]                           # streamed (tn, tn) block
    e = e + bias_mask                                       # non-edges -> ~-3e38 (single VALU add)

    m_new = jnp.maximum(m_run[...], jnp.max(e, axis=-1, keepdims=True))
    rescale = jnp.exp(m_run[...] - m_new)
    p = jnp.exp(e - m_new)                                  # masked entries underflow to exactly 0
    d_run[...] = rescale * d_run[...] + jnp.sum(p, axis=-1, keepdims=True)
    acc[...] = rescale * acc[...] + jnp.dot(p.astype(jnp.bfloat16), h_vmem[k],
                                            preferred_element_type=jnp.float32)   # MXU
    m_run[...] = m_new

    # ---- finalize this destination tile ----
    @pl.when(k == nk - 1)
    def _finalize():
        inv = pl.reciprocal(jnp.maximum(d_run[...], 1e-30), approx=False)   # exact 1/denominator
        out = acc[...] * inv + avb_ref[0][2:3, :]                           # + bias
        floor = jnp.where(l < num_layers - 1, 0.0, -jnp.inf)                # ReLU except last layer
        out = jnp.maximum(out, floor)
        # Layer l's input tile r is dead once h was computed in the prologue, so the next
        # layer's input overwrites it in place (relies on the sequential grid ordering).
        xin[r] = out
        o_ref[0] = out.astype(o_ref.dtype)


def _glorot(key, shape):
    fan_in, fan_out = shape[-2], shape[-1]
    limit = (6.0 / (fan_in + fan_out)) ** 0.5
    return jax.random.uniform(key, shape, jnp.float32, -limit, limit)


def init_gat_params(key, in_features, hidden_dims):
    """Packs all layers' weights into padded, lane-dense stacks once, at init time."""
    dims = [in_features] + list(hidden_dims)
    num_layers = len(dims) - 1
    f_pad = _round_up(max(dims), 128)
    w_stack = jnp.zeros((num_layers, f_pad, f_pad), jnp.float32)
    avb_stack = jnp.zeros((num_layers, 8, f_pad), jnp.float32)   # rows: att_src, att_dst, bias
    for i in range(num_layers):
        key, kw, ks, kd = jax.random.split(key, 4)
        f_in, f_out = dims[i], dims[i + 1]
        w_stack = w_stack.at[i, :f_in, :f_out].set(_glorot(kw, (f_in, f_out)))
        avb_stack = avb_stack.at[i, 0, :f_out].set(_glorot(ks, (1, f_out))[0])
        avb_stack = avb_stack.at[i, 1, :f_out].set(_glorot(kd, (1, f_out))[0])
        # bias row (index 2) stays zero, matching torch_geometric's zero init
    return {"w": w_stack.astype(jnp.bfloat16),    # pre-cast MXU rhs: halves W DMA/VMEM
            "avb": avb_stack, "dims": tuple(dims), "f_pad": f_pad}


def _edges_to_mask(edge_index, num_nodes, num_nodes_pad):
    """Additive attention-bias mask: 0 where an edge src->dst (or a self-loop) exists,
    -3e38 elsewhere.  Padded rows/cols stay fully masked, so padded (fake) nodes can neither
    send to nor receive from real nodes -- the in-kernel online softmax relies on this."""
    src, dst = edge_index[0], edge_index[1]
    adj = jnp.zeros((num_nodes_pad, num_nodes_pad), jnp.bool_)
    adj = adj.at[dst, src].set(True)
    idx = jnp.arange(num_nodes)
    adj = adj.at[idx, idx].set(True)    # add_self_loops=True (torch_geometric GATConv default)
    return jnp.where(adj, 0.0, _MASK_VAL).astype(jnp.bfloat16)


def gat_forward(params, x, edge_index, *, force_streamed_adj=False):
    """Mirrors GAT.forward: relu after every layer except the last. Returns (logits, memory_alloc)."""
    dims = params["dims"]
    f_pad = params["f_pad"]
    num_layers = len(dims) - 1
    n, f_in = x.shape
    assert f_in == dims[0]

    # ---- per-generation VMEM budget (v5e/v6e: 128 MiB physical, v7x: 64 MiB) ----
    try:
        vmem_cap = int(pltpu.get_tpu_info().vmem_capacity_bytes)
    except Exception:
        vmem_cap = 64 * 1024 * 1024                  # conservative (v7x-sized) fallback
    vmem_limit = int(min((vmem_cap * 3) // 4, 112 * 1024 * 1024))

    # ---- node tiling: square (tn x tn) attention blocks, online softmax over source chunks ----
    if n <= 512:
        tn = _round_up(n, 128)
    else:
        tn = 512 if vmem_cap >= 96 * 1024 * 1024 else 256
    n_pad = _round_up(n, tn)
    n_tiles = n_pad // tn

    x_pad = jnp.zeros((n_pad, f_pad), jnp.float32).at[:n, :f_in].set(x)
    x_pad = x_pad.reshape(n_tiles, tn, f_pad)

    layerwise = isinstance(edge_index, (list, tuple))
    if layerwise:
        # layer i (0-based) uses edge_index[-(i+1)]; the final layer uses edge_index[0]
        order = [edge_index[-(i + 1)] for i in range(num_layers - 1)] + [edge_index[0]]
        mask = jnp.stack([_edges_to_mask(e, n, n_pad) for e in order])     # [L, Np, Np]
    else:
        mask = _edges_to_mask(edge_index, n, n_pad)[None]                  # [1, Np, Np] (built ONCE)
    n_adj = mask.shape[0]
    # Pre-tile to (A, R*K, tn, tn) so the kernel indexes whole blocks (no in-kernel slicing).
    mask = (mask.reshape(n_adj, n_tiles, tn, n_tiles, tn)
                .transpose(0, 1, 3, 2, 4)
                .reshape(n_adj, n_tiles * n_tiles, tn, tn))

    # Keep the mask VMEM-resident across the whole layer when the double-buffered copy fits.
    adj_resident = (not force_streamed_adj) and (2 * (n_pad * n_pad * 2) <= vmem_limit // 3)
    if adj_resident:
        adj_spec = pl.BlockSpec(
            (1, n_tiles * n_tiles, tn, tn),
            (lambda l, r, k: (l, 0, 0, 0)) if layerwise else (lambda l, r, k: (0, 0, 0, 0)))
    else:
        adj_spec = pl.BlockSpec(
            (1, 1, tn, tn),
            (lambda l, r, k: (l, r * n_tiles + k, 0, 0)) if layerwise
            else (lambda l, r, k: (0, r * n_tiles + k, 0, 0)))

    kernel = functools.partial(_gat_stack_kernel, num_layers=num_layers, n_tiles=n_tiles,
                               negative_slope=0.2, adj_resident=adj_resident)

    out_pad = pl.pallas_call(
        kernel,
        out_shape=jax.ShapeDtypeStruct((n_tiles, tn, f_pad), jnp.float32),
        grid_spec=pltpu.PrefetchScalarGridSpec(
            num_scalar_prefetch=0,
            grid=(num_layers, n_tiles, n_tiles),
            in_specs=[
                pl.BlockSpec(memory_space=pl.ANY),                            # x: HBM, one manual DMA
                pl.BlockSpec((1, f_pad, f_pad), lambda l, r, k: (l, 0, 0)),   # W_l (bf16, layer-resident)
                pl.BlockSpec((1, 8, f_pad), lambda l, r, k: (l, 0, 0)),       # att_src / att_dst / bias
                adj_spec,                                                     # additive mask (bf16)
            ],
            out_specs=pl.BlockSpec((1, tn, f_pad), lambda l, r, k: (r, 0, 0)),
            scratch_shapes=[
                pltpu.VMEM((n_tiles, tn, f_pad), jnp.float32),   # layer input (rewritten in place)
                pltpu.VMEM((n_tiles, tn, f_pad), jnp.bfloat16),  # h = x_l @ W_l
                pltpu.VMEM((n_tiles, 1, tn), jnp.float32),       # per-source logits (lane-major rows)
                pltpu.VMEM((n_tiles, tn, 1), jnp.float32),       # per-destination logits
                pltpu.VMEM((tn, 1), jnp.float32),                # online-softmax running max
                pltpu.VMEM((tn, 1), jnp.float32),                # online-softmax running denominator
                pltpu.VMEM((tn, f_pad), jnp.float32),            # online-softmax accumulator
                pltpu.SemaphoreType.DMA(()),                     # seed-copy semaphore
            ]),
        compiler_params=pltpu.CompilerParams(
            # all axes carry VMEM state across grid steps -> must run sequentially
            dimension_semantics=("arbitrary", "arbitrary", "arbitrary"),
            vmem_limit_bytes=vmem_limit),
    )(x_pad, params["w"], params["avb"], mask)

    logits = out_pad.reshape(n_pad, f_pad)[:n, :dims[-1]]
    # TODO(synk): torch.cuda.memory_allocated() has no TPU/Pallas equivalent; report 0.0.
    memory_alloc = 0.0
    return logits, memory_alloc


def _gat_reference(params, x, edge_index):
    """Pure-JAX f32 reference mirroring torch_geometric GATConv (heads=1, add_self_loops=True)."""
    dims = params["dims"]
    num_layers = len(dims) - 1
    n = x.shape[0]
    w = params["w"].astype(jnp.float32)
    avb = params["avb"]
    layerwise = isinstance(edge_index, (list, tuple))
    h_in = jnp.zeros((n, params["f_pad"]), jnp.float32).at[:, :dims[0]].set(x)
    idx = jnp.arange(n)
    for i in range(num_layers):
        if layerwise:
            e_idx = edge_index[-(i + 1)] if i < num_layers - 1 else edge_index[0]
        else:
            e_idx = edge_index
        adj = jnp.zeros((n, n), jnp.bool_).at[e_idx[1], e_idx[0]].set(True).at[idx, idx].set(True)
        h = h_in @ w[i]
        a_src = h @ avb[i, 0]
        a_dst = h @ avb[i, 1]
        e = a_dst[:, None] + a_src[None, :]
        e = jnp.where(e >= 0.0, e, 0.2 * e)
        e = jnp.where(adj, e, -jnp.inf)
        att = jax.nn.softmax(e, axis=-1)
        out = att @ h + avb[i, 2][None, :]
        h_in = jnp.maximum(out, 0.0) if i < num_layers - 1 else out
    return h_in[:, :dims[-1]]


if __name__ == "__main__":
    key = jax.random.PRNGKey(0)
    n_nodes = 64
    in_features = 16
    hidden_dims = [32, 8]
    num_edges = 256

    k_x, k_e1, k_e2, k_p = jax.random.split(key, 4)
    x = jax.random.normal(k_x, (n_nodes, in_features), jnp.float32)
    edge_index = jax.random.randint(k_e1, (2, num_edges), 0, n_nodes, dtype=jnp.int32)

    params = init_gat_params(k_p, in_features, hidden_dims)

    # 1) shared adjacency (single edge_index) -- VMEM-resident mask path
    logits, mem = gat_forward(params, x, edge_index)
    logits = jax.block_until_ready(logits)
    assert logits.shape == (n_nodes, hidden_dims[-1])
    assert bool(jnp.all(jnp.isfinite(logits)))
    ref = _gat_reference(params, x, edge_index)
    err = float(jnp.max(jnp.abs(logits - ref)))
    assert err < 0.2, f"shared-adjacency mismatch vs reference: {err}"

    # 2) layer-wise adjacency (list), as in the reference module
    edge_index_list = [edge_index,
                       jax.random.randint(k_e2, (2, num_edges), 0, n_nodes, dtype=jnp.int32)]
    logits2, _ = gat_forward(params, x, edge_index_list)
    logits2 = jax.block_until_ready(logits2)
    assert logits2.shape == (n_nodes, hidden_dims[-1])
    assert bool(jnp.all(jnp.isfinite(logits2)))
    ref2 = _gat_reference(params, x, edge_index_list)
    err2 = float(jnp.max(jnp.abs(logits2 - ref2)))
    assert err2 < 0.2, f"layerwise-adjacency mismatch vs reference: {err2}"

    # 3) streamed-mask path (what very large graphs take), forced here at small size
    logits3, _ = gat_forward(params, x, edge_index, force_streamed_adj=True)
    logits3 = jax.block_until_ready(logits3)
    err3 = float(jnp.max(jnp.abs(logits3 - ref)))
    assert err3 < 0.2, f"streamed-mask mismatch vs reference: {err3}"

    print("KERNEL_OK")
</pallas_src>

<mosaic_0001>
module attributes {stable_mosaic.version = 11 : i64} {
  func.func @_gat_stack_kernel(%arg0: i32, %arg1: i32, %arg2: i32, %arg3: memref<1x128x128xf32, #tpu.memory_space<any>>, %arg4: memref<1x128x128xbf16, #tpu.memory_space<vmem>>, %arg5: memref<1x8x128xf32, #tpu.memory_space<vmem>>, %arg6: memref<1x1x128x128xbf16, #tpu.memory_space<vmem>>, %arg7: memref<1x128x128xf32, #tpu.memory_space<vmem>>, %arg8: memref<1x128x128xf32, #tpu.memory_space<vmem>>, %arg9: memref<1x128x128xbf16, #tpu.memory_space<vmem>>, %arg10: memref<1x1x128xf32, #tpu.memory_space<vmem>>, %arg11: memref<1x128x1xf32, #tpu.memory_space<vmem>>, %arg12: memref<128x1xf32, #tpu.memory_space<vmem>>, %arg13: memref<128x1xf32, #tpu.memory_space<vmem>>, %arg14: memref<128x128xf32, #tpu.memory_space<vmem>>, %arg15: memref<!tpu.dma_semaphore, #tpu.memory_space<semaphore_mem>>) attributes {dimension_semantics = [#tpu.dimension_semantics<arbitrary>, #tpu.dimension_semantics<arbitrary>, #tpu.dimension_semantics<arbitrary>], iteration_bounds = array<i64: 2, 1, 1>, scalar_prefetch = 0 : i64, scratch_operands = 8 : i64, tpu.core_type = #tpu.core_type<tc>, window_params = [{}, {transform_indices = @transform_1, window_bounds = array<i64: 1, 128, 128>}, {transform_indices = @transform_2, window_bounds = array<i64: 1, 8, 128>}, {pipeline_mode = #tpu.pipeline_mode<synchronous>, transform_indices = @transform_3, window_bounds = array<i64: 1, 1, 128, 128>}, {transform_indices = @transform_4, window_bounds = array<i64: 1, 128, 128>}]} {
    %c0_i32 = arith.constant 0 : i32
    %0 = arith.cmpi eq, %arg1, %c0_i32 : i32
    %c0_i32_0 = arith.constant 0 : i32
    %1 = arith.cmpi eq, %arg2, %c0_i32_0 : i32
    %2 = arith.andi %0, %1 : i1
    %3 = arith.extui %2 : i1 to i32
    %c0_i32_1 = arith.constant 0 : i32
    %4 = arith.cmpi ne, %3, %c0_i32_1 : i32
    scf.if %4 {
      %c0_i32_32 = arith.constant 0 : i32
      %59 = arith.cmpi eq, %arg0, %c0_i32_32 : i32
      %60 = arith.extui %59 : i1 to i32
      %c0_i32_33 = arith.constant 0 : i32
      %61 = arith.cmpi ne, %60, %c0_i32_33 : i32
      scf.if %61 {
        tpu.enqueue_dma source(%arg3 : memref<1x128x128xf32, #tpu.memory_space<any>>) target(%arg8 : memref<1x128x128xf32, #tpu.memory_space<vmem>>) target_semaphore(%arg15 : memref<!tpu.dma_semaphore, #tpu.memory_space<semaphore_mem>>)
        tpu.wait_dma2 semaphore(%arg15 : memref<!tpu.dma_semaphore, #tpu.memory_space<semaphore_mem>>) src(%arg3 : memref<1x128x128xf32, #tpu.memory_space<any>>) dst(%arg8 : memref<1x128x128xf32, #tpu.memory_space<vmem>>)
      } else {
      }
      %c0_34 = arith.constant 0 : index
      %c0_35 = arith.constant 0 : index
      %c0_36 = arith.constant 0 : index
      %62 = vector.load %arg4[%c0_34, %c0_35, %c0_36] : memref<1x128x128xbf16, #tpu.memory_space<vmem>>, vector<1x128x128xbf16>
      %63 = vector.shape_cast %62 : vector<1x128x128xbf16> to vector<128x128xbf16>
      %c0_37 = arith.constant 0 : index
      %c0_38 = arith.constant 0 : index
      %c0_39 = arith.constant 0 : index
      %64 = vector.load %arg5[%c0_37, %c0_38, %c0_39] : memref<1x8x128xf32, #tpu.memory_space<vmem>>, vector<1x8x128xf32>
      %65 = vector.shape_cast %64 : vector<1x8x128xf32> to vector<8x128xf32>
      %66 = vector.extract_strided_slice %65 {offsets = [0, 0], sizes = [1, 128], strides = [1, 1]} : vector<8x128xf32> to vector<1x128xf32>
      %67 = vector.extract_strided_slice %65 {offsets = [1, 0], sizes = [1, 128], strides = [1, 1]} : vector<8x128xf32> to vector<1x128xf32>
      %c0_i32_40 = arith.constant 0 : i32
      %68 = arith.index_cast %c0_i32_40 : i32 to index
      %c0_41 = arith.constant 0 : index
      %c0_42 = arith.constant 0 : index
      %69 = vector.load %arg8[%68, %c0_41, %c0_42] : memref<1x128x128xf32, #tpu.memory_space<vmem>>, vector<1x128x128xf32>
      %70 = vector.shape_cast %69 : vector<1x128x128xf32> to vector<128x128xf32>
      %71 = arith.truncf %70 : vector<128x128xf32> to vector<128x128xbf16>
      %cst_43 = arith.constant dense<0.000000e+00> : vector<128x128xf32>
      %72 = tpu.matmul %71, %63, %cst_43 {dimension_numbers = #tpu.dot_dimension_numbers<[1], [0], [0], [1], [0, 0, 1, 1], [], []>} : vector<128x128xbf16>, vector<128x128xbf16>, vector<128x128xf32> -> vector<128x128xf32>
      %73 = vector.broadcast %67 : vector<1x128xf32> to vector<128x128xf32>
      %74 = arith.mulf %72, %73 : vector<128x128xf32>
      %cst_44 = arith.constant dense<0.000000e+00> : vector<128xf32>
      %75 = vector.multi_reduction <add>, %74, %cst_44 [1] : vector<128x128xf32> to vector<128xf32>
      %76 = vector.shape_cast %75 : vector<128xf32> to vector<128x1xf32>
      %77 = arith.index_cast %c0_i32_40 : i32 to index
      %c0_45 = arith.constant 0 : index
      %c0_46 = arith.constant 0 : index
      %78 = vector.load %arg11[%77, %c0_45, %c0_46] : memref<1x128x1xf32, #tpu.memory_space<vmem>>, vector<1x128x1xf32>
      %79 = vector.shape_cast %78 : vector<1x128x1xf32> to vector<128x1xf32>
      %80 = vector.shape_cast %76 : vector<128x1xf32> to vector<1x128x1xf32>
      tpu.vector_store %arg11[%77, %c0_45, %c0_46], %80 {strides = array<i32>} : memref<1x128x1xf32, #tpu.memory_space<vmem>>, vector<1x128x1xf32>,
      %81 = vector.broadcast %66 : vector<1x128xf32> to vector<128x128xf32>
      %82 = arith.mulf %72, %81 : vector<128x128xf32>
      %cst_47 = arith.constant dense<0.000000e+00> : vector<128xf32>
      %83 = vector.multi_reduction <add>, %82, %cst_47 [1] : vector<128x128xf32> to vector<128xf32>
      %84 = vector.shape_cast %83 : vector<128xf32> to vector<128x1xf32>
      %85 = tpu.transpose %84, [1, 0] : vector<128x1xf32> -> vector<1x128xf32>
      %86 = arith.index_cast %c0_i32_40 : i32 to index
      %c0_48 = arith.constant 0 : index
      %c0_49 = arith.constant 0 : index
      %87 = vector.load %arg10[%86, %c0_48, %c0_49] : memref<1x1x128xf32, #tpu.memory_space<vmem>>, vector<1x1x128xf32>
      %88 = vector.shape_cast %87 : vector<1x1x128xf32> to vector<1x128xf32>
      %89 = vector.shape_cast %85 : vector<1x128xf32> to vector<1x1x128xf32>
      tpu.vector_store %arg10[%86, %c0_48, %c0_49], %89 {strides = array<i32>} : memref<1x1x128xf32, #tpu.memory_space<vmem>>, vector<1x1x128xf32>,
      %90 = arith.truncf %72 : vector<128x128xf32> to vector<128x128xbf16>
      %91 = arith.index_cast %c0_i32_40 : i32 to index
      %c0_50 = arith.constant 0 : index
      %c0_51 = arith.constant 0 : index
      %92 = vector.load %arg9[%91, %c0_50, %c0_51] : memref<1x128x128xbf16, #tpu.memory_space<vmem>>, vector<1x128x128xbf16>
      %93 = vector.shape_cast %92 : vector<1x128x128xbf16> to vector<128x128xbf16>
      %94 = vector.shape_cast %90 : vector<128x128xbf16> to vector<1x128x128xbf16>
      tpu.vector_store %arg9[%91, %c0_50, %c0_51], %94 {strides = array<i32>} : memref<1x128x128xbf16, #tpu.memory_space<vmem>>, vector<1x128x128xbf16>,
      %c1_i32_52 = arith.constant 1 : i32
    } else {
    }
    %c0_i32_2 = arith.constant 0 : i32
    %5 = arith.cmpi eq, %arg2, %c0_i32_2 : i32
    %6 = arith.extui %5 : i1 to i32
    %c0_i32_3 = arith.constant 0 : i32
    %7 = arith.cmpi ne, %6, %c0_i32_3 : i32
    scf.if %7 {
      %cst_32 = arith.constant -1.000000e+30 : f32
      %59 = vector.broadcast %cst_32 : f32 to vector<128x1xf32>
      %c0_33 = arith.constant 0 : index
      %c0_34 = arith.constant 0 : index
      %60 = vector.load %arg12[%c0_33, %c0_34] : memref<128x1xf32, #tpu.memory_space<vmem>>, vector<128x1xf32>
      tpu.vector_store %arg12[%c0_33, %c0_34], %59 {strides = array<i32>} : memref<128x1xf32, #tpu.memory_space<vmem>>, vector<128x1xf32>,
      %cst_35 = arith.constant 0.000000e+00 : f32
      %61 = vector.broadcast %cst_35 : f32 to vector<128x1xf32>
      %c0_36 = arith.constant 0 : index
      %c0_37 = arith.constant 0 : index
      %62 = vector.load %arg13[%c0_36, %c0_37] : memref<128x1xf32, #tpu.memory_space<vmem>>, vector<128x1xf32>
      tpu.vector_store %arg13[%c0_36, %c0_37], %61 {strides = array<i32>} : memref<128x1xf32, #tpu.memory_space<vmem>>, vector<128x1xf32>,
      %cst_38 = arith.constant 0.000000e+00 : f32
      %63 = vector.broadcast %cst_38 : f32 to vector<128x128xf32>
      %c0_39 = arith.constant 0 : index
      %c0_40 = arith.constant 0 : index
      %64 = vector.load %arg14[%c0_39, %c0_40] : memref<128x128xf32, #tpu.memory_space<vmem>>, vector<128x128xf32>
      tpu.vector_store %arg14[%c0_39, %c0_40], %63 {strides = array<i32>} : memref<128x128xf32, #tpu.memory_space<vmem>>, vector<128x128xf32>,
    } else {
    }
    %8 = arith.index_cast %arg1 : i32 to index
    %c0 = arith.constant 0 : index
    %c0_4 = arith.constant 0 : index
    %9 = vector.load %arg11[%8, %c0, %c0_4] : memref<1x128x1xf32, #tpu.memory_space<vmem>>, vector<1x128x1xf32>
    %10 = vector.shape_cast %9 : vector<1x128x1xf32> to vector<128x1xf32>
    %11 = arith.index_cast %arg2 : i32 to index
    %c0_5 = arith.constant 0 : index
    %c0_6 = arith.constant 0 : index
    %12 = vector.load %arg10[%11, %c0_5, %c0_6] : memref<1x1x128xf32, #tpu.memory_space<vmem>>, vector<1x1x128xf32>
    %13 = vector.shape_cast %12 : vector<1x1x128xf32> to vector<1x128xf32>
    %14 = vector.broadcast %10 : vector<128x1xf32> to vector<128x128xf32>
    %15 = vector.broadcast %13 : vector<1x128xf32> to vector<128x128xf32>
    %16 = arith.addf %14, %15 : vector<128x128xf32>
    %cst = arith.constant 0.000000e+00 : f32
    %17 = vector.broadcast %cst : f32 to vector<128x128xf32>
    %18 = arith.cmpf oge, %16, %17 : vector<128x128xf32>
    %cst_7 = arith.constant 2.000000e-01 : f32
    %19 = vector.broadcast %cst_7 : f32 to vector<128x128xf32>
    %20 = arith.mulf %19, %16 : vector<128x128xf32>
    %21 = arith.select %18, %16, %20 : vector<128x128xi1>, vector<128x128xf32>
    %c1_i32 = arith.constant 1 : i32
    %22 = arith.muli %arg1, %c1_i32 : i32
    %23 = arith.addi %22, %arg2 : i32
    %c0_8 = arith.constant 0 : index
    %24 = arith.index_cast %23 : i32 to index
    %c0_9 = arith.constant 0 : index
    %c0_10 = arith.constant 0 : index
    %25 = vector.load %arg6[%c0_8, %24, %c0_9, %c0_10] : memref<1x1x128x128xbf16, #tpu.memory_space<vmem>>, vector<1x1x128x128xbf16>
    %26 = vector.shape_cast %25 : vector<1x1x128x128xbf16> to vector<128x128xbf16>
    %27 = arith.extf %26 : vector<128x128xbf16> to vector<128x128xf32>
    %28 = arith.addf %21, %27 : vector<128x128xf32>
    %c0_11 = arith.constant 0 : index
    %c0_12 = arith.constant 0 : index
    %29 = vector.load %arg12[%c0_11, %c0_12] : memref<128x1xf32, #tpu.memory_space<vmem>>, vector<128x1xf32>
    %cst_13 = arith.constant dense<0xFF800000> : vector<128xf32>
    %30 = vector.multi_reduction <maximumf>, %28, %cst_13 [1] : vector<128x128xf32> to vector<128xf32>
    %31 = vector.shape_cast %30 : vector<128xf32> to vector<128x1xf32>
    %32 = arith.maximumf %29, %31 : vector<128x1xf32>
    %c0_14 = arith.constant 0 : index
    %c0_15 = arith.constant 0 : index
    %33 = vector.load %arg12[%c0_14, %c0_15] : memref<128x1xf32, #tpu.memory_space<vmem>>, vector<128x1xf32>
    %34 = arith.subf %33, %32 : vector<128x1xf32>
    %35 = math.exp %34 : vector<128x1xf32>
    %36 = vector.broadcast %32 : vector<128x1xf32> to vector<128x128xf32>
    %37 = arith.subf %28, %36 : vector<128x128xf32>
    %38 = math.exp %37 : vector<128x128xf32>
    %c0_16 = arith.constant 0 : index
    %c0_17 = arith.constant 0 : index
    %39 = vector.load %arg13[%c0_16, %c0_17] : memref<128x1xf32, #tpu.memory_space<vmem>>, vector<128x1xf32>
    %40 = arith.mulf %35, %39 : vector<128x1xf32>
    %cst_18 = arith.constant dense<0.000000e+00> : vector<128xf32>
    %41 = vector.multi_reduction <add>, %38, %cst_18 [1] : vector<128x128xf32> to vector<128xf32>
    %42 = vector.shape_cast %41 : vector<128xf32> to vector<128x1xf32>
    %43 = arith.addf %40, %42 : vector<128x1xf32>
    %c0_19 = arith.constant 0 : index
    %c0_20 = arith.constant 0 : index
    %44 = vector.load %arg13[%c0_19, %c0_20] : memref<128x1xf32, #tpu.memory_space<vmem>>, vector<128x1xf32>
    tpu.vector_store %arg13[%c0_19, %c0_20], %43 {strides = array<i32>} : memref<128x1xf32, #tpu.memory_space<vmem>>, vector<128x1xf32>,
    %c0_21 = arith.constant 0 : index
    %c0_22 = arith.constant 0 : index
    %45 = vector.load %arg14[%c0_21, %c0_22] : memref<128x128xf32, #tpu.memory_space<vmem>>, vector<128x128xf32>
    %46 = vector.broadcast %35 : vector<128x1xf32> to vector<128x128xf32>
    %47 = arith.mulf %46, %45 : vector<128x128xf32>
    %48 = arith.truncf %38 : vector<128x128xf32> to vector<128x128xbf16>
    %49 = arith.index_cast %arg2 : i32 to index
    %c0_23 = arith.constant 0 : index
    %c0_24 = arith.constant 0 : index
    %50 = vector.load %arg9[%49, %c0_23, %c0_24] : memref<1x128x128xbf16, #tpu.memory_space<vmem>>, vector<1x128x128xbf16>
    %51 = vector.shape_cast %50 : vector<1x128x128xbf16> to vector<128x128xbf16>
    %cst_25 = arith.constant dense<0.000000e+00> : vector<128x128xf32>
    %52 = tpu.matmul %48, %51, %cst_25 {dimension_numbers = #tpu.dot_dimension_numbers<[1], [0], [0], [1], [0, 0, 1, 1], [], []>} : vector<128x128xbf16>, vector<128x128xbf16>, vector<128x128xf32> -> vector<128x128xf32>
    %53 = arith.addf %47, %52 : vector<128x128xf32>
    %c0_26 = arith.constant 0 : index
    %c0_27 = arith.constant 0 : index
    %54 = vector.load %arg14[%c0_26, %c0_27] : memref<128x128xf32, #tpu.memory_space<vmem>>, vector<128x128xf32>
    tpu.vector_store %arg14[%c0_26, %c0_27], %53 {strides = array<i32>} : memref<128x128xf32, #tpu.memory_space<vmem>>, vector<128x128xf32>,
    %c0_28 = arith.constant 0 : index
    %c0_29 = arith.constant 0 : index
    %55 = vector.load %arg12[%c0_28, %c0_29] : memref<128x1xf32, #tpu.memory_space<vmem>>, vector<128x1xf32>
    tpu.vector_store %arg12[%c0_28, %c0_29], %32 {strides = array<i32>} : memref<128x1xf32, #tpu.memory_space<vmem>>, vector<128x1xf32>,
    %c0_i32_30 = arith.constant 0 : i32
    %56 = arith.cmpi eq, %arg2, %c0_i32_30 : i32
    %57 = arith.extui %56 : i1 to i32
    %c0_i32_31 = arith.constant 0 : i32
    %58 = arith.cmpi ne, %57, %c0_i32_31 : i32
    scf.if %58 {
      %c0_32 = arith.constant 0 : index
      %c0_33 = arith.constant 0 : index
      %59 = vector.load %arg13[%c0_32, %c0_33] : memref<128x1xf32, #tpu.memory_space<vmem>>, vector<128x1xf32>
      %cst_34 = arith.constant 1.000000e-30 : f32
      %60 = vector.broadcast %cst_34 : f32 to vector<128x1xf32>
      %61 = arith.maximumf %59, %60 : vector<128x1xf32>
      %62 = tpu.reciprocal %61 : vector<128x1xf32> -> vector<128x1xf32>
      %c0_35 = arith.constant 0 : index
      %c0_36 = arith.constant 0 : index
      %63 = vector.load %arg14[%c0_35, %c0_36] : memref<128x128xf32, #tpu.memory_space<vmem>>, vector<128x128xf32>
      %64 = vector.broadcast %62 : vector<128x1xf32> to vector<128x128xf32>
      %65 = arith.mulf %63, %64 : vector<128x128xf32>
      %c0_37 = arith.constant 0 : index
      %c0_38 = arith.constant 0 : index
      %c0_39 = arith.constant 0 : index
      %66 = vector.load %arg5[%c0_37, %c0_38, %c0_39] : memref<1x8x128xf32, #tpu.memory_space<vmem>>, vector<1x8x128xf32>
      %67 = vector.shape_cast %66 : vector<1x8x128xf32> to vector<8x128xf32>
      %68 = vector.extract_strided_slice %67 {offsets = [2, 0], sizes = [1, 128], strides = [1, 1]} : vector<8x128xf32> to vector<1x128xf32>
      %69 = vector.broadcast %68 : vector<1x128xf32> to vector<128x128xf32>
      %70 = arith.addf %65, %69 : vector<128x128xf32>
      %c1_i32_40 = arith.constant 1 : i32
      %71 = arith.cmpi slt, %arg0, %c1_i32_40 : i32
      %cst_41 = arith.constant 0.000000e+00 : f32
      %cst_42 = arith.constant 0xFF800000 : f32
      %72 = arith.select %71, %cst_41, %cst_42 : f32
      %73 = vector.broadcast %72 : f32 to vector<128x128xf32>
      %74 = arith.maximumf %70, %73 : vector<128x128xf32>
      %75 = arith.index_cast %arg1 : i32 to index
      %c0_43 = arith.constant 0 : index
      %c0_44 = arith.constant 0 : index
      %76 = vector.load %arg8[%75, %c0_43, %c0_44] : memref<1x128x128xf32, #tpu.memory_space<vmem>>, vector<1x128x128xf32>
      %77 = vector.shape_cast %76 : vector<1x128x128xf32> to vector<128x128xf32>
      %78 = vector.shape_cast %74 : vector<128x128xf32> to vector<1x128x128xf32>
      tpu.vector_store %arg8[%75, %c0_43, %c0_44], %78 {strides = array<i32>} : memref<1x128x128xf32, #tpu.memory_space<vmem>>, vector<1x128x128xf32>,
      %c0_45 = arith.constant 0 : index
      %c0_46 = arith.constant 0 : index
      %c0_47 = arith.constant 0 : index
      %79 = vector.load %arg7[%c0_45, %c0_46, %c0_47] : memref<1x128x128xf32, #tpu.memory_space<vmem>>, vector<1x128x128xf32>
      %80 = vector.shape_cast %79 : vector<1x128x128xf32> to vector<128x128xf32>
      %81 = vector.shape_cast %74 : vector<128x128xf32> to vector<1x128x128xf32>
      tpu.vector_store %arg7[%c0_45, %c0_46, %c0_47], %81 {strides = array<i32>} : memref<1x128x128xf32, #tpu.memory_space<vmem>>, vector<1x128x128xf32>,
    } else {
    }
    return
  }
  func.func @transform_1(%arg0: i32, %arg1: i32, %arg2: i32) -> (i32, i32, i32) {
    %c0_i32 = arith.constant 0 : i32
    %c0_i32_0 = arith.constant 0 : i32
    %c0_i32_1 = arith.constant 0 : i32
    return %arg0, %c0_i32, %c0_i32_0 : i32, i32, i32
  }
  func.func @transform_2(%arg0: i32, %arg1: i32, %arg2: i32) -> (i32, i32, i32) {
    %c0_i32 = arith.constant 0 : i32
    %c0_i32_0 = arith.constant 0 : i32
    %c0_i32_1 = arith.constant 0 : i32
    return %arg0, %c0_i32, %c0_i32_0 : i32, i32, i32
  }
  func.func @transform_3(%arg0: i32, %arg1: i32, %arg2: i32) -> (i32, i32, i32, i32) {
    %c0_i32 = arith.constant 0 : i32
    %c0_i32_0 = arith.constant 0 : i32
    %c0_i32_1 = arith.constant 0 : i32
    %c0_i32_2 = arith.constant 0 : i32
    %c0_i32_3 = arith.constant 0 : i32
    return %c0_i32, %c0_i32_0, %c0_i32_1, %c0_i32_2 : i32, i32, i32, i32
  }
  func.func @transform_4(%arg0: i32, %arg1: i32, %arg2: i32) -> (i32, i32, i32) {
    %c0_i32 = arith.constant 0 : i32
    %c0_i32_0 = arith.constant 0 : i32
    %c0_i32_1 = arith.constant 0 : i32
    return %arg1, %c0_i32, %c0_i32_0 : i32, i32, i32
  }
}

</mosaic_0001>

<llo_original>
// kernel: tpu_custom_call.1
$region0: #{tpu_custom_call.1}
  #allocation0 [shape = 'u32[]', space=smem, size = 0x4, offset = 0x4, fixed_abs, tag = 'smem constant byte address 0x4 - core index']
  #allocation1 [shape = 'u32[144,128]{1,0:T(1,128)}', space=vmem, size = 0x12000, scoped, tag = 'internal scratch']
  #allocation2 [shape = 'f32[1,128,128]{2,1,0:T(8,128)}', space=vmem, size = 0x10000, scoped, tag = 'scratch operand']
  #allocation3 [shape = 'bf16[1,128,128]{2,1,0:T(8,128)(2,1)}', space=vmem, size = 0x8000, scoped, tag = 'scratch operand']
  #allocation4 [shape = 'f32[1,1,128]{2,1,0:T(1,128)}', space=vmem, size = 0x200, scoped, tag = 'scratch operand']
  #allocation5 [shape = 'f32[1,128,1]{2,1,0:T(8,128)}', space=vmem, size = 0x10000, scoped, tag = 'scratch operand']
  #allocation6 [shape = 'f32[128,1]{1,0:T(8,128)}', space=vmem, size = 0x10000, scoped, tag = 'scratch operand']
  #allocation7 [shape = 'f32[128,1]{1,0:T(8,128)}', space=vmem, size = 0x10000, scoped, tag = 'scratch operand']
  #allocation8 [shape = 'f32[128,128]{1,0:T(8,128)}', space=vmem, size = 0x10000, scoped, tag = 'scratch operand']
  #allocation9 [shape = 's32[1]{0}', space=sflag, size = 0x4, scoped, tag = 'scratch operand']
  #allocation17 [shape = 's32[]', space=sflag, size = 0x4, offset = 0, fixed_abs, tag = 'sflag constant byte address 0x0 - dummy sync flag']
  #allocation18 [shape = 's32[]', space=sflag, size = 0x4, offset = 0, fixed_abs, tag = 'sflag constant byte address 0x0 - dummy sync flag']
  #allocation19 [shape = 'u32[]', space=smem, size = 0x4, offset = 0x44, fixed_abs, tag = 'smem constant byte address 0x44 - assertion arg 0']
  #allocation20 [shape = 'u32[]', space=smem, size = 0x4, offset = 0x48, fixed_abs, tag = 'smem constant byte address 0x48 - assertion arg 1']
  %s0 = inlined_call_operand.hbm [shape: f32[1,128,128], index: 0, kind: input, shape index: {}]
  %s1 = inlined_call_operand.hbm [shape: bf16[2,128,128], index: 1, kind: input, shape index: {}]
  %s2 = inlined_call_operand.hbm [shape: f32[2,8,128], index: 2, kind: input, shape index: {}]
  %s3 = inlined_call_operand.hbm [shape: bf16[1,1,128,128], index: 3, kind: input, shape index: {}]
  %s4 = inlined_call_operand.hbm [shape: f32[1,128,128], index: 4, kind: output, shape index: {}]
  %s5 = sld [smem:[#allocation0]]
  $region77: #{tpu_custom_call.1} parent=0
    _
  %s7 = ssub.s32 1, %s5
  %s8 = scalar_select 0, %s7, %s5
  $region1: #{tpu_custom_call.1} parent=0
    #allocation10 [shape = 'u8[65536]{0}', space=vmem, size = 0x10000, scoped, tag = 'input window, operand 1']
    #allocation11 [shape = 's32[2]{0}', space=sflag, size = 0x8, scoped, tag = 'scoped memory for tpu_custom_call.1']
    #allocation12 [shape = 's32[2]{0}', space=sflag, size = 0x8, scoped, tag = 'scoped memory for tpu_custom_call.1']
    #allocation13 [shape = 'u8[8192]{0}', space=vmem, size = 0x2000, scoped, tag = 'input window, operand 2']
    #allocation14 [shape = 's32[2]{0}', space=sflag, size = 0x8, scoped, tag = 'scoped memory for tpu_custom_call.1']
    #allocation15 [shape = 'u8[32768]{0}', space=vmem, size = 0x8000, scoped, tag = 'input window, operand 3, single buffered']
    #allocation16 [shape = 'u8[65536]{0}', space=vmem, size = 0x10000, scoped, tag = 'output window, operand 0, single buffered']
    %9 = vsyncpa [#allocation11], 0
    %s10 = scalar_lea.sflag [#allocation11], 1
    %11 = vsyncpa %s10, 0
    %12 = vsyncpa [#allocation14], 0
    %s13 = scalar_lea.sflag [#allocation14], 1
    %14 = vsyncpa %s13, 0
    %15 = vsyncpa [#allocation12], 0
    loop: start=0, step=1, limit=4
    $region2: #{tpu_custom_call.1} parent=1 // loop_pre_header
      _
    $region3: #{tpu_custom_call.1} parent=1 // loop_header
      %s17 = sphi 0, %s21
      %p18 = scmp.ge.s32.totalorder %s17, 4
      %s24 = sphi 0, %s43
      %s25 = sphi 0, %s39
      %s26 = sphi 0, %s35
      %s27 = sphi 0, %s24
      %s28 = sphi 0, %s25
      %s29 = sphi 0, %s26
      %s30 = sphi 0, %s27
      %s31 = sphi 0, %s28
      %s32 = sphi 0, %s29
      %s46 = sphi 0, %s48
      %s49 = sphi 0, %s46
      %s50 = sphi 0, %s49
      %s66 = sphi 0, %s50
      %s72 = sphi 0, %s74
      %s75 = sphi 0, %s72
      %s76 = sphi 0, %s75
      %s92 = sphi 0, %s76
      %s96 = sphi 0, %s96
      %s98 = sphi 0, %s96
      %s99 = sphi 0, %s98
      %s113 = sphi 0, %s99
      %s119 = sphi 0, %s121
      %s122 = sphi 0, %s119
      %s123 = sphi 0, %s122
      %s139 = sphi 0, %s123
    $region4: #{tpu_custom_call.1} parent=1 // loop_header_branch
      %20 = sbr.rel (%p18) target = $region8
    $region5: #{tpu_custom_call.1} parent=1 // loop_body
      %s22 = ssub.s32 %s17, 1
      %s23 = ssub.s32 %s17, 2
      %s33 = sadd.s32 1, %s26
      %p34 = scmp.ge.s32.totalorder %s33, 1
      %s35 = scalar_select %p34, 0, %s33
      %s36 = sadd.s32 1, %s25
      %s37 = scalar_select %p34, %s36, %s25
      %p38 = scmp.ge.s32.totalorder %s37, 1
      %s39 = scalar_select %p38, 0, %s37
      %s40 = sadd.s32 1, %s24
      %s41 = scalar_select %p38, %s40, %s24
      %p42 = scmp.ge.s32.totalorder %s41, 2
      %s43 = scalar_select %p42, 0, %s41
      %s44 = ssub.s32 %s24, %s43
      %p45 = scmp.eq.s32.totalorder %s44, 0
      %s47 = sadd.s32 %s46, 1
      %s48 = scalar_select %p45, %s46, %s47
      %p51 = pneg %p45
      %p52 = scmp.eq.s32.totalorder %s17, 1
      %p53 = por %p51, %p52
      %p54 = scmp.ne.s32.totalorder %s46, %s49
      %p55 = scmp.eq.s32.totalorder %s17, 0
      %p56 = por %p54, %p55
      %p57 = scmp.ne.s32.totalorder %s46, %s49
      %p58 = scmp.eq.s32.totalorder %s22, 1
      %p59 = por %p57, %p58
      %p60 = scmp.ne.s32.totalorder %s49, %s50
      %p61 = scmp.eq.s32.totalorder %s22, 0
      %p62 = por %p60, %p61
      %p63 = scmp.ne.s32.totalorder %s49, %s50
      %p64 = scmp.eq.s32.totalorder %s23, 1
      %p65 = por %p63, %p64
      %p67 = scmp.ne.s32.totalorder %s50, %s66
      %p68 = scmp.eq.s32.totalorder %s23, 0
      %p69 = por %p67, %p68
      %s70 = ssub.s32 %s24, %s43
      %p71 = scmp.eq.s32.totalorder %s70, 0
      %s73 = sadd.s32 %s72, 1
      %s74 = scalar_select %p71, %s72, %s73
      %p77 = pneg %p71
      %p78 = scmp.eq.s32.totalorder %s17, 1
      %p79 = por %p77, %p78
      %p80 = scmp.ne.s32.totalorder %s72, %s75
      %p81 = scmp.eq.s32.totalorder %s17, 0
      %p82 = por %p80, %p81
      %p83 = scmp.ne.s32.totalorder %s72, %s75
      %p84 = scmp.eq.s32.totalorder %s22, 1
      %p85 = por %p83, %p84
      %p86 = scmp.ne.s32.totalorder %s75, %s76
      %p87 = scmp.eq.s32.totalorder %s22, 0
      %p88 = por %p86, %p87
      %p89 = scmp.ne.s32.totalorder %s75, %s76
      %p90 = scmp.eq.s32.totalorder %s23, 1
      %p91 = por %p89, %p90
      %p93 = scmp.ne.s32.totalorder %s76, %s92
      %p94 = scmp.eq.s32.totalorder %s23, 0
      %p95 = por %p93, %p94
      %s97 = sadd.s32 %s96, 1
      %p100 = scmp.eq.s32.totalorder %s17, 1
      %p101 = scmp.ne.s32.totalorder %s96, %s98
      %p102 = scmp.eq.s32.totalorder %s17, 0
      %p103 = por %p101, %p102
      %p104 = scmp.ne.s32.totalorder %s96, %s98
      %p105 = scmp.eq.s32.totalorder %s22, 1
      %p106 = por %p104, %p105
      %p107 = scmp.ne.s32.totalorder %s98, %s99
      %p108 = scmp.eq.s32.totalorder %s22, 0
      %p109 = por %p107, %p108
      %p110 = scmp.ne.s32.totalorder %s98, %s99
      %p111 = scmp.eq.s32.totalorder %s23, 1
      %p112 = por %p110, %p111
      %p114 = scmp.ne.s32.totalorder %s99, %s113
      %p115 = scmp.eq.s32.totalorder %s23, 0
      %p116 = por %p114, %p115
      %s117 = ssub.s32 %s25, %s39
      %p118 = scmp.eq.s32.totalorder %s117, 0
      %s120 = sadd.s32 %s119, 1
      %s121 = scalar_select %p118, %s119, %s120
      %p124 = pneg %p118
      %p125 = scmp.eq.s32.totalorder %s17, 1
      %p126 = por %p124, %p125
      %p127 = scmp.ne.s32.totalorder %s119, %s122
      %p128 = scmp.eq.s32.totalorder %s17, 0
      %p129 = por %p127, %p128
      %p130 = scmp.ne.s32.totalorder %s119, %s122
      %p131 = scmp.eq.s32.totalorder %s22, 1
      %p132 = por %p130, %p131
      %p133 = scmp.ne.s32.totalorder %s122, %s123
      %p134 = scmp.eq.s32.totalorder %s22, 0
      %p135 = por %p133, %p134
      %p136 = scmp.ne.s32.totalorder %s122, %s123
      %p137 = scmp.eq.s32.totalorder %s23, 1
      %p138 = por %p136, %p137
      %p140 = scmp.ne.s32.totalorder %s123, %s139
      %p141 = scmp.eq.s32.totalorder %s23, 0
      %p142 = por %p140, %p141
      %p143 = scmp.le.s32.totalorder 1, %s17
      %p144 = scmp.lt.s32.totalorder %s17, 3
      %p145 = pnand %p143, %p144
      %p146 = pneg %p145
      // Predicated region
      $region9: #{tpu_custom_call.1} parent=5 // pred_check
        _
      $region10: #{tpu_custom_call.1} parent=5 // pred_check_branch
        %148 = sbr.rel (%p145) target = $region12
      $region11: #{tpu_custom_call.1} parent=5 // pred_region
        %s149 = ssub.s32 %s17, 1
        // Predicated region
        $region13: #{tpu_custom_call.1} parent=11 // pred_check
          %p150 = pneg %p109
        $region14: #{tpu_custom_call.1} parent=11 // pred_check_branch
          %152 = sbr.rel (%p150) target = $region16
        $region15: #{tpu_custom_call.1} parent=11 // pred_region
          %s154 = ssub.s32 1024, 1024
          %155 = vsyncadd [#allocation14], %s154
          %s156 = sshll.u32 [#allocation15], 4
          %s157 = int_to_ptr.vmem [resolvable:$true] %s156
          %162 = dma.hbm_to_vmem [thread:$0]  %s3, 1024, %s157, [#allocation14], 64, 64, 4
        $region16: #{tpu_custom_call.1} parent=11 // pred_fallthru
          _
      $region12: #{tpu_custom_call.1} parent=5 // pred_fallthru
        _
      %p163 = scmp.lt.s32.totalorder %s17, 2
      // Predicated region
      $region17: #{tpu_custom_call.1} parent=5 // pred_check
        %p164 = pneg %p163
      $region18: #{tpu_custom_call.1} parent=5 // pred_check_branch
        %166 = sbr.rel (%p164) target = $region20
      $region19: #{tpu_custom_call.1} parent=5 // pred_region
        // Predicated region
        $region21: #{tpu_custom_call.1} parent=19 // pred_check
          %p167 = pneg %p56
        $region22: #{tpu_custom_call.1} parent=19 // pred_check_branch
          %169 = sbr.rel (%p167) target = $region24
        $region23: #{tpu_custom_call.1} parent=19 // pred_region
          %s170 = sand.u32 %s46, 1
          %s171 = scalar_lea.sflag [#allocation11], %s170
          %s172 = sand.u32 %s46, 1
          %s173 = smul.addr %s172, 64
          %s174 = scalar_lea.vmem [#allocation10], %s173
          %s176 = ssub.s32 1024, 1024
          %177 = vsyncadd %s171, %s176
          %s178 = smul.addr %s24, 16
          %s179 = smul.addr %s178, 64
          %s180 = scalar_lea.hbm %s1, %s179
          %s181 = sshll.u32 %s174, 4
          %s182 = int_to_ptr.vmem [resolvable:$true] %s181
          %187 = dma.hbm_to_vmem [thread:$0]  %s180, 1024, %s182, %s171, 64, 64, 4
        $region24: #{tpu_custom_call.1} parent=19 // pred_fallthru
          _
        // Predicated region
        $region25: #{tpu_custom_call.1} parent=19 // pred_check
          %p188 = pneg %p82
        $region26: #{tpu_custom_call.1} parent=19 // pred_check_branch
          %190 = sbr.rel (%p188) target = $region28
        $region27: #{tpu_custom_call.1} parent=19 // pred_region
          %s191 = sand.u32 %s17, 1
          %s192 = scalar_lea.sflag [#allocation14], %s191
          %s193 = sand.u32 %s72, 1
          %s194 = smul.addr %s193, 8
          %s195 = scalar_lea.vmem [#allocation13], %s194
          %s197 = ssub.s32 128, 128
          %198 = vsyncadd %s192, %s197
          %s199 = smul.addr %s24, 128
          %s200 = scalar_lea.hbm %s2, %s199
          %s202 = sshll.u32 %s195, 4
          %s203 = int_to_ptr.vmem [resolvable:$true] %s202
          %205 = dma.hbm_to_vmem [thread:$0]  %s200, 128, %s203, %s192
        $region28: #{tpu_custom_call.1} parent=19 // pred_fallthru
          _
      $region20: #{tpu_custom_call.1} parent=5 // pred_fallthru
        _
      %p206 = scmp.le.s32.totalorder 1, %s17
      %p207 = scmp.lt.s32.totalorder %s17, 3
      %p208 = pnand %p206, %p207
      %p209 = pneg %p208
      // Predicated region
      $region29: #{tpu_custom_call.1} parent=5 // pred_check
        _
      $region30: #{tpu_custom_call.1} parent=5 // pred_check_branch
        %211 = sbr.rel (%p208) target = $region32
      $region31: #{tpu_custom_call.1} parent=5 // pred_region
        %s212 = ssub.s32 %s17, 1
        %s213 = sand.u32 %s49, 1
        %s214 = scalar_lea.sflag [#allocation11], %s213
        %s215 = sand.u32 %s49, 1
        %s216 = smul.addr %s215, 64
        %s217 = scalar_lea.vmem [#allocation10], %s216
        // Predicated region
        $region33: #{tpu_custom_call.1} parent=31 // pred_check
          %p218 = pneg %p62
        $region34: #{tpu_custom_call.1} parent=31 // pred_check_branch
          %220 = sbr.rel (%p218) target = $region36
        $region35: #{tpu_custom_call.1} parent=31 // pred_region
          %221 = dma.done %s214, 1024
        $region36: #{tpu_custom_call.1} parent=31 // pred_fallthru
          _
        %s222 = sand.u32 %s22, 1
        %s223 = scalar_lea.sflag [#allocation14], %s222
        %s224 = sand.u32 %s75, 1
        %s225 = smul.addr %s224, 8
        %s226 = scalar_lea.vmem [#allocation13], %s225
        // Predicated region
        $region37: #{tpu_custom_call.1} parent=31 // pred_check
          %p227 = pneg %p88
        $region38: #{tpu_custom_call.1} parent=31 // pred_check_branch
          %229 = sbr.rel (%p227) target = $region40
        $region39: #{tpu_custom_call.1} parent=31 // pred_region
          %230 = dma.done %s223, 128
        $region40: #{tpu_custom_call.1} parent=31 // pred_fallthru
          _
        // Predicated region
        $region41: #{tpu_custom_call.1} parent=31 // pred_check
          %p231 = pneg %p109
        $region42: #{tpu_custom_call.1} parent=31 // pred_check_branch
          %233 = sbr.rel (%p231) target = $region44
        $region43: #{tpu_custom_call.1} parent=31 // pred_region
          %234 = dma.done [#allocation14], 1024
        $region44: #{tpu_custom_call.1} parent=31 // pred_fallthru
          _
        %s235 = sand.u32 %s49, 1
        %s236 = scalar_lea.sflag [#allocation11], %s235
        %s237 = sand.u32 %s49, 1
        %s238 = smul.addr %s237, 64
        %s239 = scalar_lea.vmem [#allocation10], %s238
        %p240 = pneg %p62
        %p241 = pneg %p59
        %s242 = sand.u32 %s22, 1
        %s243 = scalar_lea.sflag [#allocation14], %s242
        %s244 = sand.u32 %s75, 1
        %s245 = smul.addr %s244, 8
        %s246 = scalar_lea.vmem [#allocation13], %s245
        %p247 = pneg %p88
        %p248 = pneg %p85
        %p249 = pneg %p109
        %p250 = pneg %p106
        %p251 = pneg %p135
        %p252 = pneg %p132
        %p254 = scmp.eq.s32.totalorder %s28, 0
        %p255 = scmp.eq.s32.totalorder %s29, 0
        %p256 = pnand %p254, %p255
        %p257 = pneg %p256
        // Predicated region
        $region45: #{tpu_custom_call.1} parent=31 // pred_check
          _
        $region46: #{tpu_custom_call.1} parent=31 // pred_check_branch
          %259 = sbr.rel (%p256) target = $region48
        $region47: #{tpu_custom_call.1} parent=31 // pred_region
          %p260 = scmp.eq.s32.totalorder %s27, 0
          // Predicated region
          $region49: #{tpu_custom_call.1} parent=47 // pred_check
            %p261 = pneg %p260
          $region50: #{tpu_custom_call.1} parent=47 // pred_check_branch
            %263 = sbr.rel (%p261) target = $region52
          $region51: #{tpu_custom_call.1} parent=47 // pred_region
            // Predicated region
            $region53: #{tpu_custom_call.1} parent=51 // pred_check
              _
            $region54: #{tpu_custom_call.1} parent=51 // pred_check_branch
              %265 = sbr.rel target = $region56
            $region55: #{tpu_custom_call.1} parent=51 // pred_region
              %266 = sst [smem:[#allocation19]] [#allocation18]
              %267 = sst [smem:[#allocation20]] [#allocation17]
            $region56: #{tpu_custom_call.1} parent=51 // pred_fallthru
              _
            %269 = shalt.err (0)
            %s271 = sshll.u32 [#allocation2], 4
            %s272 = int_to_ptr.vmem [resolvable:$true] %s271
            %274 = dma.hbm_to_vmem [thread:$0]  %s0, 2048, %s272, [#allocation9]
            %s275 = smul.u32 1, 128
            %s276 = smul.u32 %s275, 1
            %s277 = sshll.u32 %s276, 4
            %278 = dma.done [#allocation9], %s277
          $region52: #{tpu_custom_call.1} parent=47 // pred_fallthru
            _
          %v279 = vld [vmem:[%s217] sm:$0xf]
          %v280 = vld [vmem:[%s217 + $0x4] sm:$0xf]
          %v281 = vld [vmem:[%s217 + $0x8] sm:$0xf]
          %v282 = vld [vmem:[%s217 + $0xc] sm:$0xf]
          %v283 = vld [vmem:[%s217 + $0x10] sm:$0xf]
          %v284 = vld [vmem:[%s217 + $0x14] sm:$0xf]
          %v285 = vld [vmem:[%s217 + $0x18] sm:$0xf]
          %v286 = vld [vmem:[%s217 + $0x1c] sm:$0xf]
          %v287 = vld [vmem:[%s217 + $0x20] sm:$0xf]
          %v288 = vld [vmem:[%s217 + $0x24] sm:$0xf]
          %v289 = vld [vmem:[%s217 + $0x28] sm:$0xf]
          %v290 = vld [vmem:[%s217 + $0x2c] sm:$0xf]
          %v291 = vld [vmem:[%s217 + $0x30] sm:$0xf]
          %v292 = vld [vmem:[%s217 + $0x34] sm:$0xf]
          %v293 = vld [vmem:[%s217 + $0x38] sm:$0xf]
          %v294 = vld [vmem:[%s217 + $0x3c] sm:$0xf]
          %v295 = vld [vmem:[%s226] sm:$0xff]
          %v296 = vld [vmem:[#allocation2] sm:$0xff]
          %v297 = vld [vmem:[#allocation2 + $0x8] sm:$0xff]
          %v298 = vld [vmem:[#allocation2 + $0x10] sm:$0xff]
          %v299 = vld [vmem:[#allocation2 + $0x18] sm:$0xff]
          %v300 = vld [vmem:[#allocation2 + $0x20] sm:$0xff]
          %v301 = vld [vmem:[#allocation2 + $0x28] sm:$0xff]
          %v302 = vld [vmem:[#allocation2 + $0x30] sm:$0xff]
          %v303 = vld [vmem:[#allocation2 + $0x38] sm:$0xff]
          %v304 = vld [vmem:[#allocation2 + $0x40] sm:$0xff]
          %v305 = vld [vmem:[#allocation2 + $0x48] sm:$0xff]
          %v306 = vld [vmem:[#allocation2 + $0x50] sm:$0xff]
          %v307 = vld [vmem:[#allocation2 + $0x58] sm:$0xff]
          %v308 = vld [vmem:[#allocation2 + $0x60] sm:$0xff]
          %v309 = vld [vmem:[#allocation2 + $0x68] sm:$0xff]
          %v310 = vld [vmem:[#allocation2 + $0x70] sm:$0xff]
          %v311 = vld [vmem:[#allocation2 + $0x78] sm:$0xff]
          %v312 = vpack.c.bf16 %v297, %v296
          %v313 = vpack.c.bf16 %v299, %v298
          %v314 = vpack.c.bf16 %v301, %v300
          %v315 = vpack.c.bf16 %v303, %v302
          %v316 = vpack.c.bf16 %v305, %v304
          %v317 = vpack.c.bf16 %v307, %v306
          %v318 = vpack.c.bf16 %v309, %v308
          %v319 = vpack.c.bf16 %v311, %v310
          %v336 = vunpack.c.l.b16 %v279
          %v337 = vunpack.c.l.b16 %v280
          %v338 = vunpack.c.l.b16 %v281
          %v339 = vunpack.c.l.b16 %v282
          %v340 = vunpack.c.l.b16 %v283
          %v341 = vunpack.c.l.b16 %v284
          %v342 = vunpack.c.l.b16 %v285
          %v343 = vunpack.c.l.b16 %v286
          %v344 = vunpack.c.l.b16 %v287
          %v345 = vunpack.c.l.b16 %v288
          %v346 = vunpack.c.l.b16 %v289
          %v347 = vunpack.c.l.b16 %v290
          %v348 = vunpack.c.l.b16 %v291
          %v349 = vunpack.c.l.b16 %v292
          %v350 = vunpack.c.l.b16 %v293
          %v351 = vunpack.c.l.b16 %v294
          %v352 = vpack.c.b16 %v337, %v336
          %v353 = vpack.c.b16 %v339, %v338
          %v354 = vpack.c.b16 %v341, %v340
          %v355 = vpack.c.b16 %v343, %v342
          %v356 = vpack.c.b16 %v345, %v344
          %v357 = vpack.c.b16 %v347, %v346
          %v358 = vpack.c.b16 %v349, %v348
          %v359 = vpack.c.b16 %v351, %v350
          %368 = vmatprep.subr.bf16.mxu0 0
          %369 = vmatpush1.bf16.msra.mxu0 %v359
          %370 = vmatprep.subr.bf16.mxu0 0
          %371 = vmatpush1.bf16.msra.mxu0 %v358
          %372 = vmatprep.subr.bf16.mxu0 0
          %373 = vmatpush1.bf16.msra.mxu0 %v357
          %374 = vmatprep.subr.bf16.mxu0 0
          %375 = vmatpush1.bf16.msra.mxu0 %v356
          %376 = vmatprep.subr.bf16.mxu0 0
          %377 = vmatpush1.bf16.msra.mxu0 %v355
          %378 = vmatprep.subr.bf16.mxu0 0
          %379 = vmatpush1.bf16.msra.mxu0 %v354
          %380 = vmatprep.subr.bf16.mxu0 0
          %381 = vmatpush1.bf16.msra.mxu0 %v353
          %382 = vmatprep.subr.bf16.mxu0 0
          %383 = vmatpush1.bf16.msra.mxu0 %v352
          %384 = vmatprep.subr.bf16.mxu0 0
          %385 = vmatpush2.bf16.msra.mxu0 0
          %386 = vmatprep.subr.bf16.mxu0 0
          %387 = vmatpush2.bf16.msra.mxu0 0
          %388 = vmatprep.subr.bf16.mxu0 0
          %389 = vmatpush2.bf16.msra.mxu0 0
          %390 = vmatprep.subr.bf16.mxu0 0
          %391 = vmatpush2.bf16.msra.mxu0 0
          %392 = vmatprep.subr.bf16.mxu0 0
          %393 = vmatpush2.bf16.msra.mxu0 0
          %394 = vmatprep.subr.bf16.mxu0 0
          %395 = vmatpush2.bf16.msra.mxu0 0
          %396 = vmatprep.subr.bf16.mxu0 0
          %397 = vmatpush2.bf16.msra.mxu0 0
          %398 = vmatprep.subr.bf16.mxu0 0
          %399 = vmatpush2.bf16.msra.mxu0 0
          %400 = vmatprep.mubr.bf16.mxu0 0
          %401 = vmatmul.mubr.bf16.gmra.mxu0 %v312
          %v402 = vpop.f32.mrf.mxu0
          %v403 = vadd.f32 0.0, %v402
          %v404 = vpop.f32.mrf.mxu0
          %v405 = vpop.f32.mrf.mxu0
          %v406 = vadd.f32 0.0, %v405
          %v407 = vpop.f32.mrf.mxu0
          %408 = vmatprep.mubr.bf16.mxu0 0
          %409 = vmatmul.mubr.bf16.gmra.mxu0 %v313
          %v410 = vpop.f32.mrf.mxu0
          %v411 = vadd.f32 0.0, %v410
          %v412 = vpop.f32.mrf.mxu0
          %v413 = vpop.f32.mrf.mxu0
          %v414 = vadd.f32 0.0, %v413
          %v415 = vpop.f32.mrf.mxu0
          %416 = vmatprep.mubr.bf16.mxu0 0
          %417 = vmatmul.mubr.bf16.gmra.mxu0 %v314
          %v418 = vpop.f32.mrf.mxu0
          %v419 = vadd.f32 0.0, %v418
          %v420 = vpop.f32.mrf.mxu0
          %v421 = vpop.f32.mrf.mxu0
          %v422 = vadd.f32 0.0, %v421
          %v423 = vpop.f32.mrf.mxu0
          %424 = vmatprep.mubr.bf16.mxu0 0
          %425 = vmatmul.mubr.bf16.gmra.mxu0 %v315
          %v426 = vpop.f32.mrf.mxu0
          %v427 = vadd.f32 0.0, %v426
          %v428 = vpop.f32.mrf.mxu0
          %v429 = vpop.f32.mrf.mxu0
          %v430 = vadd.f32 0.0, %v429
          %v431 = vpop.f32.mrf.mxu0
          %432 = vmatprep.mubr.bf16.mxu0 0
          %433 = vmatmul.mubr.bf16.gmra.mxu0 %v316
          %v434 = vpop.f32.mrf.mxu0
          %v435 = vadd.f32 0.0, %v434
          %v436 = vpop.f32.mrf.mxu0
          %v437 = vpop.f32.mrf.mxu0
          %v438 = vadd.f32 0.0, %v437
          %v439 = vpop.f32.mrf.mxu0
          %440 = vmatprep.mubr.bf16.mxu0 0
          %441 = vmatmul.mubr.bf16.gmra.mxu0 %v317
          %v442 = vpop.f32.mrf.mxu0
          %v443 = vadd.f32 0.0, %v442
          %v444 = vpop.f32.mrf.mxu0
          %v445 = vpop.f32.mrf.mxu0
          %v446 = vadd.f32 0.0, %v445
          %v447 = vpop.f32.mrf.mxu0
          %448 = vmatprep.mubr.bf16.mxu0 0
          %449 = vmatmul.mubr.bf16.gmra.mxu0 %v318
          %v450 = vpop.f32.mrf.mxu0
          %v451 = vadd.f32 0.0, %v450
          %v452 = vpop.f32.mrf.mxu0
          %v453 = vpop.f32.mrf.mxu0
          %v454 = vadd.f32 0.0, %v453
          %v455 = vpop.f32.mrf.mxu0
          %456 = vmatprep.mubr.bf16.mxu0 0
          %457 = vmatmul.mubr.bf16.gmra.mxu0 %v319
          %v458 = vpop.f32.mrf.mxu0
          %v459 = vadd.f32 0.0, %v458
          %v460 = vpop.f32.mrf.mxu0
          %v461 = vpop.f32.mrf.mxu0
          %v462 = vadd.f32 0.0, %v461
          %v463 = vpop.f32.mrf.mxu0
          %464 = vdwg.mxu0
          %v465 = vlaneseq
          %v466 = vshrl.u32 %v465, 7
          %v467 = vsub.s32 1, %v466
          %v468 = vrot.slane %v295, %v467
          %v469 = vmul.f32 %v403, %v468
          %v470 = vmul.f32 %v406, %v468
          %v471 = vmul.f32 %v411, %v468
          %v472 = vmul.f32 %v414, %v468
          %v473 = vmul.f32 %v419, %v468
          %v474 = vmul.f32 %v422, %v468
          %v475 = vmul.f32 %v427, %v468
          %v476 = vmul.f32 %v430, %v468
          %v477 = vmul.f32 %v435, %v468
          %v478 = vmul.f32 %v438, %v468
          %v479 = vmul.f32 %v443, %v468
          %v480 = vmul.f32 %v446, %v468
          %v481 = vmul.f32 %v451, %v468
          %v482 = vmul.f32 %v454, %v468
          %v483 = vmul.f32 %v459, %v468
          %v484 = vmul.f32 %v462, %v468
          %485 = vadd.xlane.f32.xlu0 %v469
          %v486 = vpop.xlane.xlu0 %485
          %487 = vadd.xlane.f32.xlu0 %v470
          %v488 = vpop.xlane.xlu0 %487
          %489 = vadd.xlane.f32.xlu0 %v471
          %v490 = vpop.xlane.xlu0 %489
          %491 = vadd.xlane.f32.xlu0 %v472
          %v492 = vpop.xlane.xlu0 %491
          %493 = vadd.xlane.f32.xlu0 %v473
          %v494 = vpop.xlane.xlu0 %493
          %495 = vadd.xlane.f32.xlu0 %v474
          %v496 = vpop.xlane.xlu0 %495
          %497 = vadd.xlane.f32.xlu0 %v475
          %v498 = vpop.xlane.xlu0 %497
          %499 = vadd.xlane.f32.xlu0 %v476
          %v500 = vpop.xlane.xlu0 %499
          %501 = vadd.xlane.f32.xlu0 %v477
          %v502 = vpop.xlane.xlu0 %501
          %503 = vadd.xlane.f32.xlu0 %v478
          %v504 = vpop.xlane.xlu0 %503
          %505 = vadd.xlane.f32.xlu0 %v479
          %v506 = vpop.xlane.xlu0 %505
          %507 = vadd.xlane.f32.xlu0 %v480
          %v508 = vpop.xlane.xlu0 %507
          %509 = vadd.xlane.f32.xlu0 %v481
          %v510 = vpop.xlane.xlu0 %509
          %511 = vadd.xlane.f32.xlu0 %v482
          %v512 = vpop.xlane.xlu0 %511
          %513 = vadd.xlane.f32.xlu0 %v483
          %v514 = vpop.xlane.xlu0 %513
          %515 = vadd.xlane.f32.xlu0 %v484
          %v516 = vpop.xlane.xlu0 %515
          %vm517 = vcmask 7168
          %518 = vst.msk [vmem:[#allocation5] sm:$0xff] %vm517, %v486
          %519 = vst.msk [vmem:[#allocation5 + $0x8] sm:$0xff] %vm517, %v488
          %520 = vst.msk [vmem:[#allocation5 + $0x10] sm:$0xff] %vm517, %v490
          %521 = vst.msk [vmem:[#allocation5 + $0x18] sm:$0xff] %vm517, %v492
          %522 = vst.msk [vmem:[#allocation5 + $0x20] sm:$0xff] %vm517, %v494
          %523 = vst.msk [vmem:[#allocation5 + $0x28] sm:$0xff] %vm517, %v496
          %524 = vst.msk [vmem:[#allocation5 + $0x30] sm:$0xff] %vm517, %v498
          %525 = vst.msk [vmem:[#allocation5 + $0x38] sm:$0xff] %vm517, %v500
          %526 = vst.msk [vmem:[#allocation5 + $0x40] sm:$0xff] %vm517, %v502
          %527 = vst.msk [vmem:[#allocation5 + $0x48] sm:$0xff] %vm517, %v504
          %528 = vst.msk [vmem:[#allocation5 + $0x50] sm:$0xff] %vm517, %v506
          %529 = vst.msk [vmem:[#allocation5 + $0x58] sm:$0xff] %vm517, %v508
          %530 = vst.msk [vmem:[#allocation5 + $0x60] sm:$0xff] %vm517, %v510
          %531 = vst.msk [vmem:[#allocation5 + $0x68] sm:$0xff] %vm517, %v512
          %532 = vst.msk [vmem:[#allocation5 + $0x70] sm:$0xff] %vm517, %v514
          %533 = vst.msk [vmem:[#allocation5 + $0x78] sm:$0xff] %vm517, %v516
          %v534 = vlaneseq
          %v535 = vshrl.u32 %v534, 7
          %v536 = vsub.s32 0, %v535
          %v537 = vrot.slane %v295, %v536
          %v538 = vmul.f32 %v403, %v537
          %v539 = vmul.f32 %v406, %v537
          %v540 = vmul.f32 %v411, %v537
          %v541 = vmul.f32 %v414, %v537
          %v542 = vmul.f32 %v419, %v537
          %v543 = vmul.f32 %v422, %v537
          %v544 = vmul.f32 %v427, %v537
          %v545 = vmul.f32 %v430, %v537
          %v546 = vmul.f32 %v435, %v537
          %v547 = vmul.f32 %v438, %v537
          %v548 = vmul.f32 %v443, %v537
          %v549 = vmul.f32 %v446, %v537
          %v550 = vmul.f32 %v451, %v537
          %v551 = vmul.f32 %v454, %v537
          %v552 = vmul.f32 %v459, %v537
          %v553 = vmul.f32 %v462, %v537
          %554 = vadd.xlane.f32.xlu0 %v538
          %v555 = vpop.xlane.xlu0 %554
          %556 = vadd.xlane.f32.xlu0 %v539
          %v557 = vpop.xlane.xlu0 %556
          %558 = vadd.xlane.f32.xlu0 %v540
          %v559 = vpop.xlane.xlu0 %558
          %560 = vadd.xlane.f32.xlu0 %v541
          %v561 = vpop.xlane.xlu0 %560
          %562 = vadd.xlane.f32.xlu0 %v542
          %v563 = vpop.xlane.xlu0 %562
          %564 = vadd.xlane.f32.xlu0 %v543
          %v565 = vpop.xlane.xlu0 %564
          %566 = vadd.xlane.f32.xlu0 %v544
          %v567 = vpop.xlane.xlu0 %566
          %568 = vadd.xlane.f32.xlu0 %v545
          %v569 = vpop.xlane.xlu0 %568
          %570 = vadd.xlane.f32.xlu0 %v546
          %v571 = vpop.xlane.xlu0 %570
          %572 = vadd.xlane.f32.xlu0 %v547
          %v573 = vpop.xlane.xlu0 %572
          %574 = vadd.xlane.f32.xlu0 %v548
          %v575 = vpop.xlane.xlu0 %574
          %576 = vadd.xlane.f32.xlu0 %v549
          %v577 = vpop.xlane.xlu0 %576
          %578 = vadd.xlane.f32.xlu0 %v550
          %v579 = vpop.xlane.xlu0 %578
          %580 = vadd.xlane.f32.xlu0 %v551
          %v581 = vpop.xlane.xlu0 %580
          %582 = vadd.xlane.f32.xlu0 %v552
          %v583 = vpop.xlane.xlu0 %582
          %584 = vadd.xlane.f32.xlu0 %v553
          %v585 = vpop.xlane.xlu0 %584
          %586 = vxpose.xlu0.b32.start [1/16] %v555, 128
          %587 = vxpose.xlu0.b32.cont [2/16] %v557, 128
          %588 = vxpose.xlu0.b32.cont [3/16] %v559, 128
          %589 = vxpose.xlu0.b32.cont [4/16] %v561, 128
          %590 = vxpose.xlu0.b32.cont [5/16] %v563, 128
          %591 = vxpose.xlu0.b32.cont [6/16] %v565, 128
          %592 = vxpose.xlu0.b32.cont [7/16] %v567, 128
          %593 = vxpose.xlu0.b32.cont [8/16] %v569, 128
          %594 = vxpose.xlu0.b32.cont [9/16] %v571, 128
          %595 = vxpose.xlu0.b32.cont [10/16] %v573, 128
          %596 = vxpose.xlu0.b32.cont [11/16] %v575, 128
          %597 = vxpose.xlu0.b32.cont [12/16] %v577, 128
          %598 = vxpose.xlu0.b32.cont [13/16] %v579, 128
          %599 = vxpose.xlu0.b32.cont [14/16] %v581, 128
          %600 = vxpose.xlu0.b32.cont [15/16] %v583, 128
          %601 = vxpose.xlu0.b32.end [16/16] %v585, 128
          %v602 = vpop.trf.xlu0
          %v603 = vpop.trf.xlu0
          %v604 = vpop.trf.xlu0
          %v605 = vpop.trf.xlu0
          %v606 = vpop.trf.xlu0
          %v607 = vpop.trf.xlu0
          %v608 = vpop.trf.xlu0
          %v609 = vpop.trf.xlu0
          %v610 = vpop.trf.xlu0
          %v611 = vpop.trf.xlu0
          %v612 = vpop.trf.xlu0
          %v613 = vpop.trf.xlu0
          %v614 = vpop.trf.xlu0
          %v615 = vpop.trf.xlu0
          %v616 = vpop.trf.xlu0
          %v617 = vpop.trf.xlu0
          %618 = vst [vmem:[#allocation4] sm:$0x1] %v602
          %v619 = vpack.c.bf16 %v406, %v403
          %v620 = vpack.c.bf16 %v414, %v411
          %v621 = vpack.c.bf16 %v422, %v419
          %v622 = vpack.c.bf16 %v430, %v427
          %v623 = vpack.c.bf16 %v438, %v435
          %v624 = vpack.c.bf16 %v446, %v443
          %v625 = vpack.c.bf16 %v454, %v451
          %v626 = vpack.c.bf16 %v462, %v459
          %v635 = vunpack.c.l.b16 %v619
          %v636 = vunpack.c.h.b16 %v619
          %v637 = vunpack.c.l.b16 %v620
          %v638 = vunpack.c.h.b16 %v620
          %v639 = vunpack.c.l.b16 %v621
          %v640 = vunpack.c.h.b16 %v621
          %v641 = vunpack.c.l.b16 %v622
          %v642 = vunpack.c.h.b16 %v622
          %v643 = vunpack.c.l.b16 %v623
          %v644 = vunpack.c.h.b16 %v623
          %v645 = vunpack.c.l.b16 %v624
          %v646 = vunpack.c.h.b16 %v624
          %v647 = vunpack.c.l.b16 %v625
          %v648 = vunpack.c.h.b16 %v625
          %v649 = vunpack.c.l.b16 %v626
          %v650 = vunpack.c.h.b16 %v626
          %v651 = vpack.c.b16 %v635, %v635
          %v652 = vpack.c.b16 %v636, %v636
          %v653 = vpack.c.b16 %v637, %v637
          %v654 = vpack.c.b16 %v638, %v638
          %v655 = vpack.c.b16 %v639, %v639
          %v656 = vpack.c.b16 %v640, %v640
          %v657 = vpack.c.b16 %v641, %v641
          %v658 = vpack.c.b16 %v642, %v642
          %v659 = vpack.c.b16 %v643, %v643
          %v660 = vpack.c.b16 %v644, %v644
          %v661 = vpack.c.b16 %v645, %v645
          %v662 = vpack.c.b16 %v646, %v646
          %v663 = vpack.c.b16 %v647, %v647
          %v664 = vpack.c.b16 %v648, %v648
          %v665 = vpack.c.b16 %v649, %v649
          %v666 = vpack.c.b16 %v650, %v650
          %683 = vst [vmem:[#allocation3] sm:$0xf] %v651
          %684 = vst [vmem:[#allocation3 + $0x4] sm:$0xf] %v652
          %685 = vst [vmem:[#allocation3 + $0x8] sm:$0xf] %v653
          %686 = vst [vmem:[#allocation3 + $0xc] sm:$0xf] %v654
          %687 = vst [vmem:[#allocation3 + $0x10] sm:$0xf] %v655
          %688 = vst [vmem:[#allocation3 + $0x14] sm:$0xf] %v656
          %689 = vst [vmem:[#allocation3 + $0x18] sm:$0xf] %v657
          %690 = vst [vmem:[#allocation3 + $0x1c] sm:$0xf] %v658
          %691 = vst [vmem:[#allocation3 + $0x20] sm:$0xf] %v659
          %692 = vst [vmem:[#allocation3 + $0x24] sm:$0xf] %v660
          %693 = vst [vmem:[#allocation3 + $0x28] sm:$0xf] %v661
          %694 = vst [vmem:[#allocation3 + $0x2c] sm:$0xf] %v662
          %695 = vst [vmem:[#allocation3 + $0x30] sm:$0xf] %v663
          %696 = vst [vmem:[#allocation3 + $0x34] sm:$0xf] %v664
          %697 = vst [vmem:[#allocation3 + $0x38] sm:$0xf] %v665
          %698 = vst [vmem:[#allocation3 + $0x3c] sm:$0xf] %v666
        $region48: #{tpu_custom_call.1} parent=31 // pred_fallthru
          _
        // Predicated region
        $region57: #{tpu_custom_call.1} parent=31 // pred_check
          %p699 = pneg %p255
        $region58: #{tpu_custom_call.1} parent=31 // pred_check_branch
          %701 = sbr.rel (%p699) target = $region60
        $region59: #{tpu_custom_call.1} parent=31 // pred_region
          %vm702 = vcmask 7168
          %703 = vst.msk [vmem:[#allocation6] sm:$0xff] %vm702, -1e+30
          %704 = vst.msk [vmem:[#allocation6 + $0x8] sm:$0xff] %vm702, -1e+30
          %705 = vst.msk [vmem:[#allocation6 + $0x10] sm:$0xff] %vm702, -1e+30
          %706 = vst.msk [vmem:[#allocation6 + $0x18] sm:$0xff] %vm702, -1e+30
          %707 = vst.msk [vmem:[#allocation6 + $0x20] sm:$0xff] %vm702, -1e+30
          %708 = vst.msk [vmem:[#allocation6 + $0x28] sm:$0xff] %vm702, -1e+30
          %709 = vst.msk [vmem:[#allocation6 + $0x30] sm:$0xff] %vm702, -1e+30
          %710 = vst.msk [vmem:[#allocation6 + $0x38] sm:$0xff] %vm702, -1e+30
          %711 = vst.msk [vmem:[#allocation6 + $0x40] sm:$0xff] %vm702, -1e+30
          %712 = vst.msk [vmem:[#allocation6 + $0x48] sm:$0xff] %vm702, -1e+30
          %713 = vst.msk [vmem:[#allocation6 + $0x50] sm:$0xff] %vm702, -1e+30
          %714 = vst.msk [vmem:[#allocation6 + $0x58] sm:$0xff] %vm702, -1e+30
          %715 = vst.msk [vmem:[#allocation6 + $0x60] sm:$0xff] %vm702, -1e+30
          %716 = vst.msk [vmem:[#allocation6 + $0x68] sm:$0xff] %vm702, -1e+30
          %717 = vst.msk [vmem:[#allocation6 + $0x70] sm:$0xff] %vm702, -1e+30
          %718 = vst.msk [vmem:[#allocation6 + $0x78] sm:$0xff] %vm702, -1e+30
          %719 = vst.msk [vmem:[#allocation7] sm:$0xff] %vm702, 0.0
          %720 = vst.msk [vmem:[#allocation7 + $0x8] sm:$0xff] %vm702, 0.0
          %721 = vst.msk [vmem:[#allocation7 + $0x10] sm:$0xff] %vm702, 0.0
          %722 = vst.msk [vmem:[#allocation7 + $0x18] sm:$0xff] %vm702, 0.0
          %723 = vst.msk [vmem:[#allocation7 + $0x20] sm:$0xff] %vm702, 0.0
          %724 = vst.msk [vmem:[#allocation7 + $0x28] sm:$0xff] %vm702, 0.0
          %725 = vst.msk [vmem:[#allocation7 + $0x30] sm:$0xff] %vm702, 0.0
          %726 = vst.msk [vmem:[#allocation7 + $0x38] sm:$0xff] %vm702, 0.0
          %727 = vst.msk [vmem:[#allocation7 + $0x40] sm:$0xff] %vm702, 0.0
          %728 = vst.msk [vmem:[#allocation7 + $0x48] sm:$0xff] %vm702, 0.0
          %729 = vst.msk [vmem:[#allocation7 + $0x50] sm:$0xff] %vm702, 0.0
          %730 = vst.msk [vmem:[#allocation7 + $0x58] sm:$0xff] %vm702, 0.0
          %731 = vst.msk [vmem:[#allocation7 + $0x60] sm:$0xff] %vm702, 0.0
          %732 = vst.msk [vmem:[#allocation7 + $0x68] sm:$0xff] %vm702, 0.0
          %733 = vst.msk [vmem:[#allocation7 + $0x70] sm:$0xff] %vm702, 0.0
          %734 = vst.msk [vmem:[#allocation7 + $0x78] sm:$0xff] %vm702, 0.0
          %735 = vst [vmem:[#allocation8] sm:$0xff] 0.0
          %736 = vst [vmem:[#allocation8 + $0x8] sm:$0xff] 0.0
          %737 = vst [vmem:[#allocation8 + $0x10] sm:$0xff] 0.0
          %738 = vst [vmem:[#allocation8 + $0x18] sm:$0xff] 0.0
          %739 = vst [vmem:[#allocation8 + $0x20] sm:$0xff] 0.0
          %740 = vst [vmem:[#allocation8 + $0x28] sm:$0xff] 0.0
          %741 = vst [vmem:[#allocation8 + $0x30] sm:$0xff] 0.0
          %742 = vst [vmem:[#allocation8 + $0x38] sm:$0xff] 0.0
          %743 = vst [vmem:[#allocation8 + $0x40] sm:$0xff] 0.0
          %744 = vst [vmem:[#allocation8 + $0x48] sm:$0xff] 0.0
          %745 = vst [vmem:[#allocation8 + $0x50] sm:$0xff] 0.0
          %746 = vst [vmem:[#allocation8 + $0x58] sm:$0xff] 0.0
          %747 = vst [vmem:[#allocation8 + $0x60] sm:$0xff] 0.0
          %748 = vst [vmem:[#allocation8 + $0x68] sm:$0xff] 0.0
          %749 = vst [vmem:[#allocation8 + $0x70] sm:$0xff] 0.0
          %750 = vst [vmem:[#allocation8 + $0x78] sm:$0xff] 0.0
        $region60: #{tpu_custom_call.1} parent=31 // pred_fallthru
          _
        %s751 = smul.u32 %s28, 128
        %s752 = scalar_lea.vmem [#allocation5], %s751
        %v753 = vld [vmem:[%s752] sm:$0xff]
        %v754 = vld [vmem:[%s752 + $0x8] sm:$0xff]
        %v755 = vld [vmem:[%s752 + $0x10] sm:$0xff]
        %v756 = vld [vmem:[%s752 + $0x18] sm:$0xff]
        %v757 = vld [vmem:[%s752 + $0x20] sm:$0xff]
        %v758 = vld [vmem:[%s752 + $0x28] sm:$0xff]
        %v759 = vld [vmem:[%s752 + $0x30] sm:$0xff]
        %v760 = vld [vmem:[%s752 + $0x38] sm:$0xff]
        %v761 = vld [vmem:[%s752 + $0x40] sm:$0xff]
        %v762 = vld [vmem:[%s752 + $0x48] sm:$0xff]
        %v763 = vld [vmem:[%s752 + $0x50] sm:$0xff]
        %v764 = vld [vmem:[%s752 + $0x58] sm:$0xff]
        %v765 = vld [vmem:[%s752 + $0x60] sm:$0xff]
        %v766 = vld [vmem:[%s752 + $0x68] sm:$0xff]
        %v767 = vld [vmem:[%s752 + $0x70] sm:$0xff]
        %v768 = vld [vmem:[%s752 + $0x78] sm:$0xff]
        %s769 = scalar_lea.vmem [#allocation4], %s29
        %v770 = vld [vmem:[%s769] sm:$0x1]
        %772 = vset.pattern.permute.xlu0 0
        %773 = vperm.xlu0 %772, %v753
        %v774 = vpop.permute.xlu0 %773
        %777 = vset.pattern.permute.xlu0 0
        %778 = vperm.xlu0 %777, %v754
        %v779 = vpop.permute.xlu0 %778
        %782 = vset.pattern.permute.xlu0 0
        %783 = vperm.xlu0 %782, %v755
        %v784 = vpop.permute.xlu0 %783
        %787 = vset.pattern.permute.xlu0 0
        %788 = vperm.xlu0 %787, %v756
        %v789 = vpop.permute.xlu0 %788
        %792 = vset.pattern.permute.xlu0 0
        %793 = vperm.xlu0 %792, %v757
        %v794 = vpop.permute.xlu0 %793
        %797 = vset.pattern.permute.xlu0 0
        %798 = vperm.xlu0 %797, %v758
        %v799 = vpop.permute.xlu0 %798
        %802 = vset.pattern.permute.xlu0 0
        %803 = vperm.xlu0 %802, %v759
        %v804 = vpop.permute.xlu0 %803
        %807 = vset.pattern.permute.xlu0 0
        %808 = vperm.xlu0 %807, %v760
        %v809 = vpop.permute.xlu0 %808
        %812 = vset.pattern.permute.xlu0 0
        %813 = vperm.xlu0 %812, %v761
        %v814 = vpop.permute.xlu0 %813
        %817 = vset.pattern.permute.xlu0 0
        %818 = vperm.xlu0 %817, %v762
        %v819 = vpop.permute.xlu0 %818
        %822 = vset.pattern.permute.xlu0 0
        %823 = vperm.xlu0 %822, %v763
        %v824 = vpop.permute.xlu0 %823
        %827 = vset.pattern.permute.xlu0 0
        %828 = vperm.xlu0 %827, %v764
        %v829 = vpop.permute.xlu0 %828
        %832 = vset.pattern.permute.xlu0 0
        %833 = vperm.xlu0 %832, %v765
        %v834 = vpop.permute.xlu0 %833
        %837 = vset.pattern.permute.xlu0 0
        %838 = vperm.xlu0 %837, %v766
        %v839 = vpop.permute.xlu0 %838
        %842 = vset.pattern.permute.xlu0 0
        %843 = vperm.xlu0 %842, %v767
        %v844 = vpop.permute.xlu0 %843
        %847 = vset.pattern.permute.xlu0 0
        %848 = vperm.xlu0 %847, %v768
        %v849 = vpop.permute.xlu0 %848
        %v852 = vlaneseq
        %v853 = vshrl.u32 %v852, 7
        %v854 = vsub.s32 0, %v853
        %v855 = vrot.slane %v770, %v854
        %v857 = vadd.f32 %v774, %v855
        %v858 = vadd.f32 %v779, %v855
        %v859 = vadd.f32 %v784, %v855
        %v860 = vadd.f32 %v789, %v855
        %v861 = vadd.f32 %v794, %v855
        %v862 = vadd.f32 %v799, %v855
        %v863 = vadd.f32 %v804, %v855
        %v864 = vadd.f32 %v809, %v855
        %v865 = vadd.f32 %v814, %v855
        %v866 = vadd.f32 %v819, %v855
        %v867 = vadd.f32 %v824, %v855
        %v868 = vadd.f32 %v829, %v855
        %v869 = vadd.f32 %v834, %v855
        %v870 = vadd.f32 %v839, %v855
        %v871 = vadd.f32 %v844, %v855
        %v872 = vadd.f32 %v849, %v855
        %vm873 = vcmp.ge.f32.partialorder %v857, 0.0
        %vm874 = vcmp.ge.f32.partialorder %v858, 0.0
        %vm875 = vcmp.ge.f32.partialorder %v859, 0.0
        %vm876 = vcmp.ge.f32.partialorder %v860, 0.0
        %vm877 = vcmp.ge.f32.partialorder %v861, 0.0
        %vm878 = vcmp.ge.f32.partialorder %v862, 0.0
        %vm879 = vcmp.ge.f32.partialorder %v863, 0.0
        %vm880 = vcmp.ge.f32.partialorder %v864, 0.0
        %vm881 = vcmp.ge.f32.partialorder %v865, 0.0
        %vm882 = vcmp.ge.f32.partialorder %v866, 0.0
        %vm883 = vcmp.ge.f32.partialorder %v867, 0.0
        %vm884 = vcmp.ge.f32.partialorder %v868, 0.0
        %vm885 = vcmp.ge.f32.partialorder %v869, 0.0
        %vm886 = vcmp.ge.f32.partialorder %v870, 0.0
        %vm887 = vcmp.ge.f32.partialorder %v871, 0.0
        %vm888 = vcmp.ge.f32.partialorder %v872, 0.0
        %v889 = vmul.f32 %v857, 0.2
        %v890 = vmul.f32 %v858, 0.2
        %v891 = vmul.f32 %v859, 0.2
        %v892 = vmul.f32 %v860, 0.2
        %v893 = vmul.f32 %v861, 0.2
        %v894 = vmul.f32 %v862, 0.2
        %v895 = vmul.f32 %v863, 0.2
        %v896 = vmul.f32 %v864, 0.2
        %v897 = vmul.f32 %v865, 0.2
        %v898 = vmul.f32 %v866, 0.2
        %v899 = vmul.f32 %v867, 0.2
        %v900 = vmul.f32 %v868, 0.2
        %v901 = vmul.f32 %v869, 0.2
        %v902 = vmul.f32 %v870, 0.2
        %v903 = vmul.f32 %v871, 0.2
        %v904 = vmul.f32 %v872, 0.2
        %v905 = vsel %vm873, %v857, %v889
        %v906 = vsel %vm874, %v858, %v890
        %v907 = vsel %vm875, %v859, %v891
        %v908 = vsel %vm876, %v860, %v892
        %v909 = vsel %vm877, %v861, %v893
        %v910 = vsel %vm878, %v862, %v894
        %v911 = vsel %vm879, %v863, %v895
        %v912 = vsel %vm880, %v864, %v896
        %v913 = vsel %vm881, %v865, %v897
        %v914 = vsel %vm882, %v866, %v898
        %v915 = vsel %vm883, %v867, %v899
        %v916 = vsel %vm884, %v868, %v900
        %v917 = vsel %vm885, %v869, %v901
        %v918 = vsel %vm886, %v870, %v902
        %v919 = vsel %vm887, %v871, %v903
        %v920 = vsel %vm888, %v872, %v904
        %s921 = sadd.s32 %s28, %s29
        %s922 = smul.u32 %s921, 16
        %s923 = smul.addr %s922, 4
        %s924 = scalar_lea.vmem [#allocation15], %s923
        %v925 = vld [vmem:[%s924] sm:$0xf]
        %v926 = vld [vmem:[%s924 + $0x4] sm:$0xf]
        %v927 = vld [vmem:[%s924 + $0x8] sm:$0xf]
        %v928 = vld [vmem:[%s924 + $0xc] sm:$0xf]
        %v929 = vld [vmem:[%s924 + $0x10] sm:$0xf]
        %v930 = vld [vmem:[%s924 + $0x14] sm:$0xf]
        %v931 = vld [vmem:[%s924 + $0x18] sm:$0xf]
        %v932 = vld [vmem:[%s924 + $0x1c] sm:$0xf]
        %v933 = vld [vmem:[%s924 + $0x20] sm:$0xf]
        %v934 = vld [vmem:[%s924 + $0x24] sm:$0xf]
        %v935 = vld [vmem:[%s924 + $0x28] sm:$0xf]
        %v936 = vld [vmem:[%s924 + $0x2c] sm:$0xf]
        %v937 = vld [vmem:[%s924 + $0x30] sm:$0xf]
        %v938 = vld [vmem:[%s924 + $0x34] sm:$0xf]
        %v939 = vld [vmem:[%s924 + $0x38] sm:$0xf]
        %v940 = vld [vmem:[%s924 + $0x3c] sm:$0xf]
        %v941 = vunpack.c.l.bf16 %v925
        %v942 = vunpack.c.l.bf16 %v926
        %v943 = vunpack.c.l.bf16 %v927
        %v944 = vunpack.c.l.bf16 %v928
        %v945 = vunpack.c.l.bf16 %v929
        %v946 = vunpack.c.l.bf16 %v930
        %v947 = vunpack.c.l.bf16 %v931
        %v948 = vunpack.c.l.bf16 %v932
        %v949 = vunpack.c.l.bf16 %v933
        %v950 = vunpack.c.l.bf16 %v934
        %v951 = vunpack.c.l.bf16 %v935
        %v952 = vunpack.c.l.bf16 %v936
        %v953 = vunpack.c.l.bf16 %v937
        %v954 = vunpack.c.l.bf16 %v938
        %v955 = vunpack.c.l.bf16 %v939
        %v956 = vunpack.c.l.bf16 %v940
        %v957 = vadd.f32 %v905, %v941
        %v958 = vadd.f32 %v906, %v942
        %v959 = vadd.f32 %v907, %v943
        %v960 = vadd.f32 %v908, %v944
        %v961 = vadd.f32 %v909, %v945
        %v962 = vadd.f32 %v910, %v946
        %v963 = vadd.f32 %v911, %v947
        %v964 = vadd.f32 %v912, %v948
        %v965 = vadd.f32 %v913, %v949
        %v966 = vadd.f32 %v914, %v950
        %v967 = vadd.f32 %v915, %v951
        %v968 = vadd.f32 %v916, %v952
        %v969 = vadd.f32 %v917, %v953
        %v970 = vadd.f32 %v918, %v954
        %v971 = vadd.f32 %v919, %v955
        %v972 = vadd.f32 %v920, %v956
        %v973 = vld [vmem:[#allocation6] sm:$0xff]
        %v974 = vld [vmem:[#allocation6 + $0x8] sm:$0xff]
        %v975 = vld [vmem:[#allocation6 + $0x10] sm:$0xff]
        %v976 = vld [vmem:[#allocation6 + $0x18] sm:$0xff]
        %v977 = vld [vmem:[#allocation6 + $0x20] sm:$0xff]
        %v978 = vld [vmem:[#allocation6 + $0x28] sm:$0xff]
        %v979 = vld [vmem:[#allocation6 + $0x30] sm:$0xff]
        %v980 = vld [vmem:[#allocation6 + $0x38] sm:$0xff]
        %v981 = vld [vmem:[#allocation6 + $0x40] sm:$0xff]
        %v982 = vld [vmem:[#allocation6 + $0x48] sm:$0xff]
        %v983 = vld [vmem:[#allocation6 + $0x50] sm:$0xff]
        %v984 = vld [vmem:[#allocation6 + $0x58] sm:$0xff]
        %v985 = vld [vmem:[#allocation6 + $0x60] sm:$0xff]
        %v986 = vld [vmem:[#allocation6 + $0x68] sm:$0xff]
        %v987 = vld [vmem:[#allocation6 + $0x70] sm:$0xff]
        %v988 = vld [vmem:[#allocation6 + $0x78] sm:$0xff]
        %989 = vmax.xlane.f32.xlu0 %v957
        %v990 = vpop.xlane.xlu0 %989
        %991 = vmax.xlane.f32.xlu0 %v958
        %v992 = vpop.xlane.xlu0 %991
        %993 = vmax.xlane.f32.xlu0 %v959
        %v994 = vpop.xlane.xlu0 %993
        %995 = vmax.xlane.f32.xlu0 %v960
        %v996 = vpop.xlane.xlu0 %995
        %997 = vmax.xlane.f32.xlu0 %v961
        %v998 = vpop.xlane.xlu0 %997
        %999 = vmax.xlane.f32.xlu0 %v962
        %v1000 = vpop.xlane.xlu0 %999
        %1001 = vmax.xlane.f32.xlu0 %v963
        %v1002 = vpop.xlane.xlu0 %1001
        %1003 = vmax.xlane.f32.xlu0 %v964
        %v1004 = vpop.xlane.xlu0 %1003
        %1005 = vmax.xlane.f32.xlu0 %v965
        %v1006 = vpop.xlane.xlu0 %1005
        %1007 = vmax.xlane.f32.xlu0 %v966
        %v1008 = vpop.xlane.xlu0 %1007
        %1009 = vmax.xlane.f32.xlu0 %v967
        %v1010 = vpop.xlane.xlu0 %1009
        %1011 = vmax.xlane.f32.xlu0 %v968
        %v1012 = vpop.xlane.xlu0 %1011
        %1013 = vmax.xlane.f32.xlu0 %v969
        %v1014 = vpop.xlane.xlu0 %1013
        %1015 = vmax.xlane.f32.xlu0 %v970
        %v1016 = vpop.xlane.xlu0 %1015
        %1017 = vmax.xlane.f32.xlu0 %v971
        %v1018 = vpop.xlane.xlu0 %1017
        %1019 = vmax.xlane.f32.xlu0 %v972
        %v1020 = vpop.xlane.xlu0 %1019
        %v1021 = vmax.f32 %v973, %v990
        %v1022 = vmax.f32 %v974, %v992
        %v1023 = vmax.f32 %v975, %v994
        %v1024 = vmax.f32 %v976, %v996
        %v1025 = vmax.f32 %v977, %v998
        %v1026 = vmax.f32 %v978, %v1000
        %v1027 = vmax.f32 %v979, %v1002
        %v1028 = vmax.f32 %v980, %v1004
        %v1029 = vmax.f32 %v981, %v1006
        %v1030 = vmax.f32 %v982, %v1008
        %v1031 = vmax.f32 %v983, %v1010
        %v1032 = vmax.f32 %v984, %v1012
        %v1033 = vmax.f32 %v985, %v1014
        %v1034 = vmax.f32 %v986, %v1016
        %v1035 = vmax.f32 %v987, %v1018
        %v1036 = vmax.f32 %v988, %v1020
        %v1037 = vsub.f32 %v973, %v1021
        %v1038 = vsub.f32 %v974, %v1022
        %v1039 = vsub.f32 %v975, %v1023
        %v1040 = vsub.f32 %v976, %v1024
        %v1041 = vsub.f32 %v977, %v1025
        %v1042 = vsub.f32 %v978, %v1026
        %v1043 = vsub.f32 %v979, %v1027
        %v1044 = vsub.f32 %v980, %v1028
        %v1045 = vsub.f32 %v981, %v1029
        %v1046 = vsub.f32 %v982, %v1030
        %v1047 = vsub.f32 %v983, %v1031
        %v1048 = vsub.f32 %v984, %v1032
        %v1049 = vsub.f32 %v985, %v1033
        %v1050 = vsub.f32 %v986, %v1034
        %v1051 = vsub.f32 %v987, %v1035
        %v1052 = vsub.f32 %v988, %v1036
        %v1053 = vmul.f32 %v1037, 1.442695
        %v1054 = vpow.pop %v1053
        %v1055 = vmul.f32 %v1038, 1.442695
        %v1056 = vpow.pop %v1055
        %v1057 = vmul.f32 %v1039, 1.442695
        %v1058 = vpow.pop %v1057
        %v1059 = vmul.f32 %v1040, 1.442695
        %v1060 = vpow.pop %v1059
        %v1061 = vmul.f32 %v1041, 1.442695
        %v1062 = vpow.pop %v1061
        %v1063 = vmul.f32 %v1042, 1.442695
        %v1064 = vpow.pop %v1063
        %v1065 = vmul.f32 %v1043, 1.442695
        %v1066 = vpow.pop %v1065
        %v1067 = vmul.f32 %v1044, 1.442695
        %v1068 = vpow.pop %v1067
        %v1069 = vmul.f32 %v1045, 1.442695
        %v1070 = vpow.pop %v1069
        %v1071 = vmul.f32 %v1046, 1.442695
        %v1072 = vpow.pop %v1071
        %v1073 = vmul.f32 %v1047, 1.442695
        %v1074 = vpow.pop %v1073
        %v1075 = vmul.f32 %v1048, 1.442695
        %v1076 = vpow.pop %v1075
        %v1077 = vmul.f32 %v1049, 1.442695
        %v1078 = vpow.pop %v1077
        %v1079 = vmul.f32 %v1050, 1.442695
        %v1080 = vpow.pop %v1079
        %v1081 = vmul.f32 %v1051, 1.442695
        %v1082 = vpow.pop %v1081
        %v1083 = vmul.f32 %v1052, 1.442695
        %v1084 = vpow.pop %v1083
        %1086 = vset.pattern.permute.xlu0 0
        %1087 = vperm.xlu0 %1086, %v1021
        %v1088 = vpop.permute.xlu0 %1087
        %1091 = vset.pattern.permute.xlu0 0
        %1092 = vperm.xlu0 %1091, %v1022
        %v1093 = vpop.permute.xlu0 %1092
        %1096 = vset.pattern.permute.xlu0 0
        %1097 = vperm.xlu0 %1096, %v1023
        %v1098 = vpop.permute.xlu0 %1097
        %1101 = vset.pattern.permute.xlu0 0
        %1102 = vperm.xlu0 %1101, %v1024
        %v1103 = vpop.permute.xlu0 %1102
        %1106 = vset.pattern.permute.xlu0 0
        %1107 = vperm.xlu0 %1106, %v1025
        %v1108 = vpop.permute.xlu0 %1107
        %1111 = vset.pattern.permute.xlu0 0
        %1112 = vperm.xlu0 %1111, %v1026
        %v1113 = vpop.permute.xlu0 %1112
        %1116 = vset.pattern.permute.xlu0 0
        %1117 = vperm.xlu0 %1116, %v1027
        %v1118 = vpop.permute.xlu0 %1117
        %1121 = vset.pattern.permute.xlu0 0
        %1122 = vperm.xlu0 %1121, %v1028
        %v1123 = vpop.permute.xlu0 %1122
        %1126 = vset.pattern.permute.xlu0 0
        %1127 = vperm.xlu0 %1126, %v1029
        %v1128 = vpop.permute.xlu0 %1127
        %1131 = vset.pattern.permute.xlu0 0
        %1132 = vperm.xlu0 %1131, %v1030
        %v1133 = vpop.permute.xlu0 %1132
        %1136 = vset.pattern.permute.xlu0 0
        %1137 = vperm.xlu0 %1136, %v1031
        %v1138 = vpop.permute.xlu0 %1137
        %1141 = vset.pattern.permute.xlu0 0
        %1142 = vperm.xlu0 %1141, %v1032
        %v1143 = vpop.permute.xlu0 %1142
        %1146 = vset.pattern.permute.xlu0 0
        %1147 = vperm.xlu0 %1146, %v1033
        %v1148 = vpop.permute.xlu0 %1147
        %1151 = vset.pattern.permute.xlu0 0
        %1152 = vperm.xlu0 %1151, %v1034
        %v1153 = vpop.permute.xlu0 %1152
        %1156 = vset.pattern.permute.xlu0 0
        %1157 = vperm.xlu0 %1156, %v1035
        %v1158 = vpop.permute.xlu0 %1157
        %1161 = vset.pattern.permute.xlu0 0
        %1162 = vperm.xlu0 %1161, %v1036
        %v1163 = vpop.permute.xlu0 %1162
        %v1165 = vsub.f32 %v957, %v1088
        %v1166 = vsub.f32 %v958, %v1093
        %v1167 = vsub.f32 %v959, %v1098
        %v1168 = vsub.f32 %v960, %v1103
        %v1169 = vsub.f32 %v961, %v1108
        %v1170 = vsub.f32 %v962, %v1113
        %v1171 = vsub.f32 %v963, %v1118
        %v1172 = vsub.f32 %v964, %v1123
        %v1173 = vsub.f32 %v965, %v1128
        %v1174 = vsub.f32 %v966, %v1133
        %v1175 = vsub.f32 %v967, %v1138
        %v1176 = vsub.f32 %v968, %v1143
        %v1177 = vsub.f32 %v969, %v1148
        %v1178 = vsub.f32 %v970, %v1153
        %v1179 = vsub.f32 %v971, %v1158
        %v1180 = vsub.f32 %v972, %v1163
        %v1181 = vmul.f32 %v1165, 1.442695
        %v1182 = vpow.pop %v1181
        %v1183 = vmul.f32 %v1166, 1.442695
        %v1184 = vpow.pop %v1183
        %v1185 = vmul.f32 %v1167, 1.442695
        %v1186 = vpow.pop %v1185
        %v1187 = vmul.f32 %v1168, 1.442695
        %v1188 = vpow.pop %v1187
        %v1189 = vmul.f32 %v1169, 1.442695
        %v1190 = vpow.pop %v1189
        %v1191 = vmul.f32 %v1170, 1.442695
        %v1192 = vpow.pop %v1191
        %v1193 = vmul.f32 %v1171, 1.442695
        %v1194 = vpow.pop %v1193
        %v1195 = vmul.f32 %v1172, 1.442695
        %v1196 = vpow.pop %v1195
        %v1197 = vmul.f32 %v1173, 1.442695
        %v1198 = vpow.pop %v1197
        %v1199 = vmul.f32 %v1174, 1.442695
        %v1200 = vpow.pop %v1199
        %v1201 = vmul.f32 %v1175, 1.442695
        %v1202 = vpow.pop %v1201
        %v1203 = vmul.f32 %v1176, 1.442695
        %v1204 = vpow.pop %v1203
        %v1205 = vmul.f32 %v1177, 1.442695
        %v1206 = vpow.pop %v1205
        %v1207 = vmul.f32 %v1178, 1.442695
        %v1208 = vpow.pop %v1207
        %v1209 = vmul.f32 %v1179, 1.442695
        %v1210 = vpow.pop %v1209
        %v1211 = vmul.f32 %v1180, 1.442695
        %v1212 = vpow.pop %v1211
        %v1213 = vld [vmem:[#allocation7] sm:$0xff]
        %v1214 = vld [vmem:[#allocation7 + $0x8] sm:$0xff]
        %v1215 = vld [vmem:[#allocation7 + $0x10] sm:$0xff]
        %v1216 = vld [vmem:[#allocation7 + $0x18] sm:$0xff]
        %v1217 = vld [vmem:[#allocation7 + $0x20] sm:$0xff]
        %v1218 = vld [vmem:[#allocation7 + $0x28] sm:$0xff]
        %v1219 = vld [vmem:[#allocation7 + $0x30] sm:$0xff]
        %v1220 = vld [vmem:[#allocation7 + $0x38] sm:$0xff]
        %v1221 = vld [vmem:[#allocation7 + $0x40] sm:$0xff]
        %v1222 = vld [vmem:[#allocation7 + $0x48] sm:$0xff]
        %v1223 = vld [vmem:[#allocation7 + $0x50] sm:$0xff]
        %v1224 = vld [vmem:[#allocation7 + $0x58] sm:$0xff]
        %v1225 = vld [vmem:[#allocation7 + $0x60] sm:$0xff]
        %v1226 = vld [vmem:[#allocation7 + $0x68] sm:$0xff]
        %v1227 = vld [vmem:[#allocation7 + $0x70] sm:$0xff]
        %v1228 = vld [vmem:[#allocation7 + $0x78] sm:$0xff]
        %v1229 = vmul.f32 %v1054, %v1213
        %v1230 = vmul.f32 %v1056, %v1214
        %v1231 = vmul.f32 %v1058, %v1215
        %v1232 = vmul.f32 %v1060, %v1216
        %v1233 = vmul.f32 %v1062, %v1217
        %v1234 = vmul.f32 %v1064, %v1218
        %v1235 = vmul.f32 %v1066, %v1219
        %v1236 = vmul.f32 %v1068, %v1220
        %v1237 = vmul.f32 %v1070, %v1221
        %v1238 = vmul.f32 %v1072, %v1222
        %v1239 = vmul.f32 %v1074, %v1223
        %v1240 = vmul.f32 %v1076, %v1224
        %v1241 = vmul.f32 %v1078, %v1225
        %v1242 = vmul.f32 %v1080, %v1226
        %v1243 = vmul.f32 %v1082, %v1227
        %v1244 = vmul.f32 %v1084, %v1228
        %1245 = vadd.xlane.f32.xlu0 %v1182
        %v1246 = vpop.xlane.xlu0 %1245
        %1247 = vadd.xlane.f32.xlu0 %v1184
        %v1248 = vpop.xlane.xlu0 %1247
        %1249 = vadd.xlane.f32.xlu0 %v1186
        %v1250 = vpop.xlane.xlu0 %1249
        %1251 = vadd.xlane.f32.xlu0 %v1188
        %v1252 = vpop.xlane.xlu0 %1251
        %1253 = vadd.xlane.f32.xlu0 %v1190
        %v1254 = vpop.xlane.xlu0 %1253
        %1255 = vadd.xlane.f32.xlu0 %v1192
        %v1256 = vpop.xlane.xlu0 %1255
        %1257 = vadd.xlane.f32.xlu0 %v1194
        %v1258 = vpop.xlane.xlu0 %1257
        %1259 = vadd.xlane.f32.xlu0 %v1196
        %v1260 = vpop.xlane.xlu0 %1259
        %1261 = vadd.xlane.f32.xlu0 %v1198
        %v1262 = vpop.xlane.xlu0 %1261
        %1263 = vadd.xlane.f32.xlu0 %v1200
        %v1264 = vpop.xlane.xlu0 %1263
        %1265 = vadd.xlane.f32.xlu0 %v1202
        %v1266 = vpop.xlane.xlu0 %1265
        %1267 = vadd.xlane.f32.xlu0 %v1204
        %v1268 = vpop.xlane.xlu0 %1267
        %1269 = vadd.xlane.f32.xlu0 %v1206
        %v1270 = vpop.xlane.xlu0 %1269
        %1271 = vadd.xlane.f32.xlu0 %v1208
        %v1272 = vpop.xlane.xlu0 %1271
        %1273 = vadd.xlane.f32.xlu0 %v1210
        %v1274 = vpop.xlane.xlu0 %1273
        %1275 = vadd.xlane.f32.xlu0 %v1212
        %v1276 = vpop.xlane.xlu0 %1275
        %v1277 = vadd.f32 %v1229, %v1246
        %v1278 = vadd.f32 %v1230, %v1248
        %v1279 = vadd.f32 %v1231, %v1250
        %v1280 = vadd.f32 %v1232, %v1252
        %v1281 = vadd.f32 %v1233, %v1254
        %v1282 = vadd.f32 %v1234, %v1256
        %v1283 = vadd.f32 %v1235, %v1258
        %v1284 = vadd.f32 %v1236, %v1260
        %v1285 = vadd.f32 %v1237, %v1262
        %v1286 = vadd.f32 %v1238, %v1264
        %v1287 = vadd.f32 %v1239, %v1266
        %v1288 = vadd.f32 %v1240, %v1268
        %v1289 = vadd.f32 %v1241, %v1270
        %v1290 = vadd.f32 %v1242, %v1272
        %v1291 = vadd.f32 %v1243, %v1274
        %v1292 = vadd.f32 %v1244, %v1276
        %vm1293 = vcmask 7168
        %1294 = vst.msk [vmem:[#allocation7] sm:$0xff] %vm1293, %v1277
        %1295 = vst.msk [vmem:[#allocation7 + $0x8] sm:$0xff] %vm1293, %v1278
        %1296 = vst.msk [vmem:[#allocation7 + $0x10] sm:$0xff] %vm1293, %v1279
        %1297 = vst.msk [vmem:[#allocation7 + $0x18] sm:$0xff] %vm1293, %v1280
        %1298 = vst.msk [vmem:[#allocation7 + $0x20] sm:$0xff] %vm1293, %v1281
        %1299 = vst.msk [vmem:[#allocation7 + $0x28] sm:$0xff] %vm1293, %v1282
        %1300 = vst.msk [vmem:[#allocation7 + $0x30] sm:$0xff] %vm1293, %v1283
        %1301 = vst.msk [vmem:[#allocation7 + $0x38] sm:$0xff] %vm1293, %v1284
        %1302 = vst.msk [vmem:[#allocation7 + $0x40] sm:$0xff] %vm1293, %v1285
        %1303 = vst.msk [vmem:[#allocation7 + $0x48] sm:$0xff] %vm1293, %v1286
        %1304 = vst.msk [vmem:[#allocation7 + $0x50] sm:$0xff] %vm1293, %v1287
        %1305 = vst.msk [vmem:[#allocation7 + $0x58] sm:$0xff] %vm1293, %v1288
        %1306 = vst.msk [vmem:[#allocation7 + $0x60] sm:$0xff] %vm1293, %v1289
        %1307 = vst.msk [vmem:[#allocation7 + $0x68] sm:$0xff] %vm1293, %v1290
        %1308 = vst.msk [vmem:[#allocation7 + $0x70] sm:$0xff] %vm1293, %v1291
        %1309 = vst.msk [vmem:[#allocation7 + $0x78] sm:$0xff] %vm1293, %v1292
        %v1310 = vld [vmem:[#allocation8] sm:$0xff]
        %v1311 = vld [vmem:[#allocation8 + $0x8] sm:$0xff]
        %v1312 = vld [vmem:[#allocation8 + $0x10] sm:$0xff]
        %v1313 = vld [vmem:[#allocation8 + $0x18] sm:$0xff]
        %v1314 = vld [vmem:[#allocation8 + $0x20] sm:$0xff]
        %v1315 = vld [vmem:[#allocation8 + $0x28] sm:$0xff]
        %v1316 = vld [vmem:[#allocation8 + $0x30] sm:$0xff]
        %v1317 = vld [vmem:[#allocation8 + $0x38] sm:$0xff]
        %v1318 = vld [vmem:[#allocation8 + $0x40] sm:$0xff]
        %v1319 = vld [vmem:[#allocation8 + $0x48] sm:$0xff]
        %v1320 = vld [vmem:[#allocation8 + $0x50] sm:$0xff]
        %v1321 = vld [vmem:[#allocation8 + $0x58] sm:$0xff]
        %v1322 = vld [vmem:[#allocation8 + $0x60] sm:$0xff]
        %v1323 = vld [vmem:[#allocation8 + $0x68] sm:$0xff]
        %v1324 = vld [vmem:[#allocation8 + $0x70] sm:$0xff]
        %v1325 = vld [vmem:[#allocation8 + $0x78] sm:$0xff]
        %1327 = vset.pattern.permute.xlu0 0
        %1328 = vperm.xlu0 %1327, %v1054
        %v1329 = vpop.permute.xlu0 %1328
        %1332 = vset.pattern.permute.xlu0 0
        %1333 = vperm.xlu0 %1332, %v1056
        %v1334 = vpop.permute.xlu0 %1333
        %1337 = vset.pattern.permute.xlu0 0
        %1338 = vperm.xlu0 %1337, %v1058
        %v1339 = vpop.permute.xlu0 %1338
        %1342 = vset.pattern.permute.xlu0 0
        %1343 = vperm.xlu0 %1342, %v1060
        %v1344 = vpop.permute.xlu0 %1343
        %1347 = vset.pattern.permute.xlu0 0
        %1348 = vperm.xlu0 %1347, %v1062
        %v1349 = vpop.permute.xlu0 %1348
        %1352 = vset.pattern.permute.xlu0 0
        %1353 = vperm.xlu0 %1352, %v1064
        %v1354 = vpop.permute.xlu0 %1353
        %1357 = vset.pattern.permute.xlu0 0
        %1358 = vperm.xlu0 %1357, %v1066
        %v1359 = vpop.permute.xlu0 %1358
        %1362 = vset.pattern.permute.xlu0 0
        %1363 = vperm.xlu0 %1362, %v1068
        %v1364 = vpop.permute.xlu0 %1363
        %1367 = vset.pattern.permute.xlu0 0
        %1368 = vperm.xlu0 %1367, %v1070
        %v1369 = vpop.permute.xlu0 %1368
        %1372 = vset.pattern.permute.xlu0 0
        %1373 = vperm.xlu0 %1372, %v1072
        %v1374 = vpop.permute.xlu0 %1373
        %1377 = vset.pattern.permute.xlu0 0
        %1378 = vperm.xlu0 %1377, %v1074
        %v1379 = vpop.permute.xlu0 %1378
        %1382 = vset.pattern.permute.xlu0 0
        %1383 = vperm.xlu0 %1382, %v1076
        %v1384 = vpop.permute.xlu0 %1383
        %1387 = vset.pattern.permute.xlu0 0
        %1388 = vperm.xlu0 %1387, %v1078
        %v1389 = vpop.permute.xlu0 %1388
        %1392 = vset.pattern.permute.xlu0 0
        %1393 = vperm.xlu0 %1392, %v1080
        %v1394 = vpop.permute.xlu0 %1393
        %1397 = vset.pattern.permute.xlu0 0
        %1398 = vperm.xlu0 %1397, %v1082
        %v1399 = vpop.permute.xlu0 %1398
        %1402 = vset.pattern.permute.xlu0 0
        %1403 = vperm.xlu0 %1402, %v1084
        %v1404 = vpop.permute.xlu0 %1403
        %v1406 = vmul.f32 %v1329, %v1310
        %v1407 = vmul.f32 %v1334, %v1311
        %v1408 = vmul.f32 %v1339, %v1312
        %v1409 = vmul.f32 %v1344, %v1313
        %v1410 = vmul.f32 %v1349, %v1314
        %v1411 = vmul.f32 %v1354, %v1315
        %v1412 = vmul.f32 %v1359, %v1316
        %v1413 = vmul.f32 %v1364, %v1317
        %v1414 = vmul.f32 %v1369, %v1318
        %v1415 = vmul.f32 %v1374, %v1319
        %v1416 = vmul.f32 %v1379, %v1320
        %v1417 = vmul.f32 %v1384, %v1321
        %v1418 = vmul.f32 %v1389, %v1322
        %v1419 = vmul.f32 %v1394, %v1323
        %v1420 = vmul.f32 %v1399, %v1324
        %v1421 = vmul.f32 %v1404, %v1325
        %v1422 = vpack.c.bf16 %v1184, %v1182
        %v1423 = vpack.c.bf16 %v1188, %v1186
        %v1424 = vpack.c.bf16 %v1192, %v1190
        %v1425 = vpack.c.bf16 %v1196, %v1194
        %v1426 = vpack.c.bf16 %v1200, %v1198
        %v1427 = vpack.c.bf16 %v1204, %v1202
        %v1428 = vpack.c.bf16 %v1208, %v1206
        %v1429 = vpack.c.bf16 %v1212, %v1210
        %s1430 = smul.u32 %s29, 16
        %s1431 = smul.addr %s1430, 4
        %s1432 = scalar_lea.vmem [#allocation3], %s1431
        %v1433 = vld [vmem:[%s1432] sm:$0xf]
        %v1434 = vld [vmem:[%s1432 + $0x4] sm:$0xf]
        %v1435 = vld [vmem:[%s1432 + $0x8] sm:$0xf]
        %v1436 = vld [vmem:[%s1432 + $0xc] sm:$0xf]
        %v1437 = vld [vmem:[%s1432 + $0x10] sm:$0xf]
        %v1438 = vld [vmem:[%s1432 + $0x14] sm:$0xf]
        %v1439 = vld [vmem:[%s1432 + $0x18] sm:$0xf]
        %v1440 = vld [vmem:[%s1432 + $0x1c] sm:$0xf]
        %v1441 = vld [vmem:[%s1432 + $0x20] sm:$0xf]
        %v1442 = vld [vmem:[%s1432 + $0x24] sm:$0xf]
        %v1443 = vld [vmem:[%s1432 + $0x28] sm:$0xf]
        %v1444 = vld [vmem:[%s1432 + $0x2c] sm:$0xf]
        %v1445 = vld [vmem:[%s1432 + $0x30] sm:$0xf]
        %v1446 = vld [vmem:[%s1432 + $0x34] sm:$0xf]
        %v1447 = vld [vmem:[%s1432 + $0x38] sm:$0xf]
        %v1448 = vld [vmem:[%s1432 + $0x3c] sm:$0xf]
        %v1465 = vunpack.c.l.b16 %v1433
        %v1466 = vunpack.c.l.b16 %v1434
        %v1467 = vunpack.c.l.b16 %v1435
        %v1468 = vunpack.c.l.b16 %v1436
        %v1469 = vunpack.c.l.b16 %v1437
        %v1470 = vunpack.c.l.b16 %v1438
        %v1471 = vunpack.c.l.b16 %v1439
        %v1472 = vunpack.c.l.b16 %v1440
        %v1473 = vunpack.c.l.b16 %v1441
        %v1474 = vunpack.c.l.b16 %v1442
        %v1475 = vunpack.c.l.b16 %v1443
        %v1476 = vunpack.c.l.b16 %v1444
        %v1477 = vunpack.c.l.b16 %v1445
        %v1478 = vunpack.c.l.b16 %v1446
        %v1479 = vunpack.c.l.b16 %v1447
        %v1480 = vunpack.c.l.b16 %v1448
        %v1481 = vpack.c.b16 %v1466, %v1465
        %v1482 = vpack.c.b16 %v1468, %v1467
        %v1483 = vpack.c.b16 %v1470, %v1469
        %v1484 = vpack.c.b16 %v1472, %v1471
        %v1485 = vpack.c.b16 %v1474, %v1473
        %v1486 = vpack.c.b16 %v1476, %v1475
        %v1487 = vpack.c.b16 %v1478, %v1477
        %v1488 = vpack.c.b16 %v1480, %v1479
        %1497 = vmatprep.subr.bf16.mxu0 0
        %1498 = vmatpush1.bf16.msra.mxu0 %v1488
        %1499 = vmatprep.subr.bf16.mxu0 0
        %1500 = vmatpush1.bf16.msra.mxu0 %v1487
        %1501 = vmatprep.subr.bf16.mxu0 0
        %1502 = vmatpush1.bf16.msra.mxu0 %v1486
        %1503 = vmatprep.subr.bf16.mxu0 0
        %1504 = vmatpush1.bf16.msra.mxu0 %v1485
        %1505 = vmatprep.subr.bf16.mxu0 0
        %1506 = vmatpush1.bf16.msra.mxu0 %v1484
        %1507 = vmatprep.subr.bf16.mxu0 0
        %1508 = vmatpush1.bf16.msra.mxu0 %v1483
        %1509 = vmatprep.subr.bf16.mxu0 0
        %1510 = vmatpush1.bf16.msra.mxu0 %v1482
        %1511 = vmatprep.subr.bf16.mxu0 0
        %1512 = vmatpush1.bf16.msra.mxu0 %v1481
        %1513 = vmatprep.subr.bf16.mxu0 0
        %1514 = vmatpush2.bf16.msra.mxu0 0
        %1515 = vmatprep.subr.bf16.mxu0 0
        %1516 = vmatpush2.bf16.msra.mxu0 0
        %1517 = vmatprep.subr.bf16.mxu0 0
        %1518 = vmatpush2.bf16.msra.mxu0 0
        %1519 = vmatprep.subr.bf16.mxu0 0
        %1520 = vmatpush2.bf16.msra.mxu0 0
        %1521 = vmatprep.subr.bf16.mxu0 0
        %1522 = vmatpush2.bf16.msra.mxu0 0
        %1523 = vmatprep.subr.bf16.mxu0 0
        %1524 = vmatpush2.bf16.msra.mxu0 0
        %1525 = vmatprep.subr.bf16.mxu0 0
        %1526 = vmatpush2.bf16.msra.mxu0 0
        %1527 = vmatprep.subr.bf16.mxu0 0
        %1528 = vmatpush2.bf16.msra.mxu0 0
        %1529 = vmatprep.mubr.bf16.mxu0 0
        %1530 = vmatmul.mubr.bf16.gmra.mxu0 %v1422
        %v1531 = vpop.f32.mrf.mxu0
        %v1532 = vadd.f32 0.0, %v1531
        %v1533 = vpop.f32.mrf.mxu0
        %v1534 = vpop.f32.mrf.mxu0
        %v1535 = vadd.f32 0.0, %v1534
        %v1536 = vpop.f32.mrf.mxu0
        %1537 = vmatprep.mubr.bf16.mxu0 0
        %1538 = vmatmul.mubr.bf16.gmra.mxu0 %v1423
        %v1539 = vpop.f32.mrf.mxu0
        %v1540 = vadd.f32 0.0, %v1539
        %v1541 = vpop.f32.mrf.mxu0
        %v1542 = vpop.f32.mrf.mxu0
        %v1543 = vadd.f32 0.0, %v1542
        %v1544 = vpop.f32.mrf.mxu0
        %1545 = vmatprep.mubr.bf16.mxu0 0
        %1546 = vmatmul.mubr.bf16.gmra.mxu0 %v1424
        %v1547 = vpop.f32.mrf.mxu0
        %v1548 = vadd.f32 0.0, %v1547
        %v1549 = vpop.f32.mrf.mxu0
        %v1550 = vpop.f32.mrf.mxu0
        %v1551 = vadd.f32 0.0, %v1550
        %v1552 = vpop.f32.mrf.mxu0
        %1553 = vmatprep.mubr.bf16.mxu0 0
        %1554 = vmatmul.mubr.bf16.gmra.mxu0 %v1425
        %v1555 = vpop.f32.mrf.mxu0
        %v1556 = vadd.f32 0.0, %v1555
        %v1557 = vpop.f32.mrf.mxu0
        %v1558 = vpop.f32.mrf.mxu0
        %v1559 = vadd.f32 0.0, %v1558
        %v1560 = vpop.f32.mrf.mxu0
        %1561 = vmatprep.mubr.bf16.mxu0 0
        %1562 = vmatmul.mubr.bf16.gmra.mxu0 %v1426
        %v1563 = vpop.f32.mrf.mxu0
        %v1564 = vadd.f32 0.0, %v1563
        %v1565 = vpop.f32.mrf.mxu0
        %v1566 = vpop.f32.mrf.mxu0
        %v1567 = vadd.f32 0.0, %v1566
        %v1568 = vpop.f32.mrf.mxu0
        %1569 = vmatprep.mubr.bf16.mxu0 0
        %1570 = vmatmul.mubr.bf16.gmra.mxu0 %v1427
        %v1571 = vpop.f32.mrf.mxu0
        %v1572 = vadd.f32 0.0, %v1571
        %v1573 = vpop.f32.mrf.mxu0
        %v1574 = vpop.f32.mrf.mxu0
        %v1575 = vadd.f32 0.0, %v1574
        %v1576 = vpop.f32.mrf.mxu0
        %1577 = vmatprep.mubr.bf16.mxu0 0
        %1578 = vmatmul.mubr.bf16.gmra.mxu0 %v1428
        %v1579 = vpop.f32.mrf.mxu0
        %v1580 = vadd.f32 0.0, %v1579
        %v1581 = vpop.f32.mrf.mxu0
        %v1582 = vpop.f32.mrf.mxu0
        %v1583 = vadd.f32 0.0, %v1582
        %v1584 = vpop.f32.mrf.mxu0
        %1585 = vmatprep.mubr.bf16.mxu0 0
        %1586 = vmatmul.mubr.bf16.gmra.mxu0 %v1429
        %v1587 = vpop.f32.mrf.mxu0
        %v1588 = vadd.f32 0.0, %v1587
        %v1589 = vpop.f32.mrf.mxu0
        %v1590 = vpop.f32.mrf.mxu0
        %v1591 = vadd.f32 0.0, %v1590
        %v1592 = vpop.f32.mrf.mxu0
        %1593 = vdwg.mxu0
        %v1594 = vadd.f32 %v1406, %v1532
        %v1595 = vadd.f32 %v1407, %v1535
        %v1596 = vadd.f32 %v1408, %v1540
        %v1597 = vadd.f32 %v1409, %v1543
        %v1598 = vadd.f32 %v1410, %v1548
        %v1599 = vadd.f32 %v1411, %v1551
        %v1600 = vadd.f32 %v1412, %v1556
        %v1601 = vadd.f32 %v1413, %v1559
        %v1602 = vadd.f32 %v1414, %v1564
        %v1603 = vadd.f32 %v1415, %v1567
        %v1604 = vadd.f32 %v1416, %v1572
        %v1605 = vadd.f32 %v1417, %v1575
        %v1606 = vadd.f32 %v1418, %v1580
        %v1607 = vadd.f32 %v1419, %v1583
        %v1608 = vadd.f32 %v1420, %v1588
        %v1609 = vadd.f32 %v1421, %v1591
        %1610 = vst [vmem:[#allocation8] sm:$0xff] %v1594
        %1611 = vst [vmem:[#allocation8 + $0x8] sm:$0xff] %v1595
        %1612 = vst [vmem:[#allocation8 + $0x10] sm:$0xff] %v1596
        %1613 = vst [vmem:[#allocation8 + $0x18] sm:$0xff] %v1597
        %1614 = vst [vmem:[#allocation8 + $0x20] sm:$0xff] %v1598
        %1615 = vst [vmem:[#allocation8 + $0x28] sm:$0xff] %v1599
        %1616 = vst [vmem:[#allocation8 + $0x30] sm:$0xff] %v1600
        %1617 = vst [vmem:[#allocation8 + $0x38] sm:$0xff] %v1601
        %1618 = vst [vmem:[#allocation8 + $0x40] sm:$0xff] %v1602
        %1619 = vst [vmem:[#allocation8 + $0x48] sm:$0xff] %v1603
        %1620 = vst [vmem:[#allocation8 + $0x50] sm:$0xff] %v1604
        %1621 = vst [vmem:[#allocation8 + $0x58] sm:$0xff] %v1605
        %1622 = vst [vmem:[#allocation8 + $0x60] sm:$0xff] %v1606
        %1623 = vst [vmem:[#allocation8 + $0x68] sm:$0xff] %v1607
        %1624 = vst [vmem:[#allocation8 + $0x70] sm:$0xff] %v1608
        %1625 = vst [vmem:[#allocation8 + $0x78] sm:$0xff] %v1609
        %1626 = vst.msk [vmem:[#allocation6] sm:$0xff] %vm1293, %v1021
        %1627 = vst.msk [vmem:[#allocation6 + $0x8] sm:$0xff] %vm1293, %v1022
        %1628 = vst.msk [vmem:[#allocation6 + $0x10] sm:$0xff] %vm1293, %v1023
        %1629 = vst.msk [vmem:[#allocation6 + $0x18] sm:$0xff] %vm1293, %v1024
        %1630 = vst.msk [vmem:[#allocation6 + $0x20] sm:$0xff] %vm1293, %v1025
        %1631 = vst.msk [vmem:[#allocation6 + $0x28] sm:$0xff] %vm1293, %v1026
        %1632 = vst.msk [vmem:[#allocation6 + $0x30] sm:$0xff] %vm1293, %v1027
        %1633 = vst.msk [vmem:[#allocation6 + $0x38] sm:$0xff] %vm1293, %v1028
        %1634 = vst.msk [vmem:[#allocation6 + $0x40] sm:$0xff] %vm1293, %v1029
        %1635 = vst.msk [vmem:[#allocation6 + $0x48] sm:$0xff] %vm1293, %v1030
        %1636 = vst.msk [vmem:[#allocation6 + $0x50] sm:$0xff] %vm1293, %v1031
        %1637 = vst.msk [vmem:[#allocation6 + $0x58] sm:$0xff] %vm1293, %v1032
        %1638 = vst.msk [vmem:[#allocation6 + $0x60] sm:$0xff] %vm1293, %v1033
        %1639 = vst.msk [vmem:[#allocation6 + $0x68] sm:$0xff] %vm1293, %v1034
        %1640 = vst.msk [vmem:[#allocation6 + $0x70] sm:$0xff] %vm1293, %v1035
        %1641 = vst.msk [vmem:[#allocation6 + $0x78] sm:$0xff] %vm1293, %v1036
        // Predicated region
        $region61: #{tpu_custom_call.1} parent=31 // pred_check
          %p1642 = pneg %p255
        $region62: #{tpu_custom_call.1} parent=31 // pred_check_branch
          %1644 = sbr.rel (%p1642) target = $region64
        $region63: #{tpu_custom_call.1} parent=31 // pred_region
          %v1645 = vld [vmem:[#allocation7] sm:$0xff]
          %v1646 = vld [vmem:[#allocation7 + $0x8] sm:$0xff]
          %v1647 = vld [vmem:[#allocation7 + $0x10] sm:$0xff]
          %v1648 = vld [vmem:[#allocation7 + $0x18] sm:$0xff]
          %v1649 = vld [vmem:[#allocation7 + $0x20] sm:$0xff]
          %v1650 = vld [vmem:[#allocation7 + $0x28] sm:$0xff]
          %v1651 = vld [vmem:[#allocation7 + $0x30] sm:$0xff]
          %v1652 = vld [vmem:[#allocation7 + $0x38] sm:$0xff]
          %v1653 = vld [vmem:[#allocation7 + $0x40] sm:$0xff]
          %v1654 = vld [vmem:[#allocation7 + $0x48] sm:$0xff]
          %v1655 = vld [vmem:[#allocation7 + $0x50] sm:$0xff]
          %v1656 = vld [vmem:[#allocation7 + $0x58] sm:$0xff]
          %v1657 = vld [vmem:[#allocation7 + $0x60] sm:$0xff]
          %v1658 = vld [vmem:[#allocation7 + $0x68] sm:$0xff]
          %v1659 = vld [vmem:[#allocation7 + $0x70] sm:$0xff]
          %v1660 = vld [vmem:[#allocation7 + $0x78] sm:$0xff]
          %v1661 = vmax.f32 %v1645, 1e-30
          %v1662 = vmax.f32 %v1646, 1e-30
          %v1663 = vmax.f32 %v1647, 1e-30
          %v1664 = vmax.f32 %v1648, 1e-30
          %v1665 = vmax.f32 %v1649, 1e-30
          %v1666 = vmax.f32 %v1650, 1e-30
          %v1667 = vmax.f32 %v1651, 1e-30
          %v1668 = vmax.f32 %v1652, 1e-30
          %v1669 = vmax.f32 %v1653, 1e-30
          %v1670 = vmax.f32 %v1654, 1e-30
          %v1671 = vmax.f32 %v1655, 1e-30
          %v1672 = vmax.f32 %v1656, 1e-30
          %v1673 = vmax.f32 %v1657, 1e-30
          %v1674 = vmax.f32 %v1658, 1e-30
          %v1675 = vmax.f32 %v1659, 1e-30
          %v1676 = vmax.f32 %v1660, 1e-30
          %v1677 = vrcp.pop %v1661
          %v1678 = vrcp.pop %v1662
          %v1679 = vrcp.pop %v1663
          %v1680 = vrcp.pop %v1664
          %v1681 = vrcp.pop %v1665
          %v1682 = vrcp.pop %v1666
          %v1683 = vrcp.pop %v1667
          %v1684 = vrcp.pop %v1668
          %v1685 = vrcp.pop %v1669
          %v1686 = vrcp.pop %v1670
          %v1687 = vrcp.pop %v1671
          %v1688 = vrcp.pop %v1672
          %v1689 = vrcp.pop %v1673
          %v1690 = vrcp.pop %v1674
          %v1691 = vrcp.pop %v1675
          %v1692 = vrcp.pop %v1676
          %v1693 = vld [vmem:[#allocation8] sm:$0xff]
          %v1694 = vld [vmem:[#allocation8 + $0x8] sm:$0xff]
          %v1695 = vld [vmem:[#allocation8 + $0x10] sm:$0xff]
          %v1696 = vld [vmem:[#allocation8 + $0x18] sm:$0xff]
          %v1697 = vld [vmem:[#allocation8 + $0x20] sm:$0xff]
          %v1698 = vld [vmem:[#allocation8 + $0x28] sm:$0xff]
          %v1699 = vld [vmem:[#allocation8 + $0x30] sm:$0xff]
          %v1700 = vld [vmem:[#allocation8 + $0x38] sm:$0xff]
          %v1701 = vld [vmem:[#allocation8 + $0x40] sm:$0xff]
          %v1702 = vld [vmem:[#allocation8 + $0x48] sm:$0xff]
          %v1703 = vld [vmem:[#allocation8 + $0x50] sm:$0xff]
          %v1704 = vld [vmem:[#allocation8 + $0x58] sm:$0xff]
          %v1705 = vld [vmem:[#allocation8 + $0x60] sm:$0xff]
          %v1706 = vld [vmem:[#allocation8 + $0x68] sm:$0xff]
          %v1707 = vld [vmem:[#allocation8 + $0x70] sm:$0xff]
          %v1708 = vld [vmem:[#allocation8 + $0x78] sm:$0xff]
          %1710 = vset.pattern.permute.xlu0 0
          %1711 = vperm.xlu0 %1710, %v1677
          %v1712 = vpop.permute.xlu0 %1711
          %1715 = vset.pattern.permute.xlu0 0
          %1716 = vperm.xlu0 %1715, %v1678
          %v1717 = vpop.permute.xlu0 %1716
          %1720 = vset.pattern.permute.xlu0 0
          %1721 = vperm.xlu0 %1720, %v1679
          %v1722 = vpop.permute.xlu0 %1721
          %1725 = vset.pattern.permute.xlu0 0
          %1726 = vperm.xlu0 %1725, %v1680
          %v1727 = vpop.permute.xlu0 %1726
          %1730 = vset.pattern.permute.xlu0 0
          %1731 = vperm.xlu0 %1730, %v1681
          %v1732 = vpop.permute.xlu0 %1731
          %1735 = vset.pattern.permute.xlu0 0
          %1736 = vperm.xlu0 %1735, %v1682
          %v1737 = vpop.permute.xlu0 %1736
          %1740 = vset.pattern.permute.xlu0 0
          %1741 = vperm.xlu0 %1740, %v1683
          %v1742 = vpop.permute.xlu0 %1741
          %1745 = vset.pattern.permute.xlu0 0
          %1746 = vperm.xlu0 %1745, %v1684
          %v1747 = vpop.permute.xlu0 %1746
          %1750 = vset.pattern.permute.xlu0 0
          %1751 = vperm.xlu0 %1750, %v1685
          %v1752 = vpop.permute.xlu0 %1751
          %1755 = vset.pattern.permute.xlu0 0
          %1756 = vperm.xlu0 %1755, %v1686
          %v1757 = vpop.permute.xlu0 %1756
          %1760 = vset.pattern.permute.xlu0 0
          %1761 = vperm.xlu0 %1760, %v1687
          %v1762 = vpop.permute.xlu0 %1761
          %1765 = vset.pattern.permute.xlu0 0
          %1766 = vperm.xlu0 %1765, %v1688
          %v1767 = vpop.permute.xlu0 %1766
          %1770 = vset.pattern.permute.xlu0 0
          %1771 = vperm.xlu0 %1770, %v1689
          %v1772 = vpop.permute.xlu0 %1771
          %1775 = vset.pattern.permute.xlu0 0
          %1776 = vperm.xlu0 %1775, %v1690
          %v1777 = vpop.permute.xlu0 %1776
          %1780 = vset.pattern.permute.xlu0 0
          %1781 = vperm.xlu0 %1780, %v1691
          %v1782 = vpop.permute.xlu0 %1781
          %1785 = vset.pattern.permute.xlu0 0
          %1786 = vperm.xlu0 %1785, %v1692
          %v1787 = vpop.permute.xlu0 %1786
          %v1789 = vmul.f32 %v1693, %v1712
          %v1790 = vmul.f32 %v1694, %v1717
          %v1791 = vmul.f32 %v1695, %v1722
          %v1792 = vmul.f32 %v1696, %v1727
          %v1793 = vmul.f32 %v1697, %v1732
          %v1794 = vmul.f32 %v1698, %v1737
          %v1795 = vmul.f32 %v1699, %v1742
          %v1796 = vmul.f32 %v1700, %v1747
          %v1797 = vmul.f32 %v1701, %v1752
          %v1798 = vmul.f32 %v1702, %v1757
          %v1799 = vmul.f32 %v1703, %v1762
          %v1800 = vmul.f32 %v1704, %v1767
          %v1801 = vmul.f32 %v1705, %v1772
          %v1802 = vmul.f32 %v1706, %v1777
          %v1803 = vmul.f32 %v1707, %v1782
          %v1804 = vmul.f32 %v1708, %v1787
          %v1805 = vld [vmem:[%s226] sm:$0xff]
          %v1806 = vlaneseq
          %v1807 = vshrl.u32 %v1806, 7
          %v1808 = vsub.s32 2, %v1807
          %v1809 = vrot.slane %v1805, %v1808
          %v1810 = vadd.f32 %v1789, %v1809
          %v1811 = vadd.f32 %v1790, %v1809
          %v1812 = vadd.f32 %v1791, %v1809
          %v1813 = vadd.f32 %v1792, %v1809
          %v1814 = vadd.f32 %v1793, %v1809
          %v1815 = vadd.f32 %v1794, %v1809
          %v1816 = vadd.f32 %v1795, %v1809
          %v1817 = vadd.f32 %v1796, %v1809
          %v1818 = vadd.f32 %v1797, %v1809
          %v1819 = vadd.f32 %v1798, %v1809
          %v1820 = vadd.f32 %v1799, %v1809
          %v1821 = vadd.f32 %v1800, %v1809
          %v1822 = vadd.f32 %v1801, %v1809
          %v1823 = vadd.f32 %v1802, %v1809
          %v1824 = vadd.f32 %v1803, %v1809
          %v1825 = vadd.f32 %v1804, %v1809
          %p1826 = scmp.lt.s32.totalorder %s27, 1
          %s1827 = scalar_select %p1826, 0.0, -inf
          %v1828 = vstv %s1827
          %v1829 = vmax.f32 %v1810, %v1828
          %v1830 = vmax.f32 %v1811, %v1828
          %v1831 = vmax.f32 %v1812, %v1828
          %v1832 = vmax.f32 %v1813, %v1828
          %v1833 = vmax.f32 %v1814, %v1828
          %v1834 = vmax.f32 %v1815, %v1828
          %v1835 = vmax.f32 %v1816, %v1828
          %v1836 = vmax.f32 %v1817, %v1828
          %v1837 = vmax.f32 %v1818, %v1828
          %v1838 = vmax.f32 %v1819, %v1828
          %v1839 = vmax.f32 %v1820, %v1828
          %v1840 = vmax.f32 %v1821, %v1828
          %v1841 = vmax.f32 %v1822, %v1828
          %v1842 = vmax.f32 %v1823, %v1828
          %v1843 = vmax.f32 %v1824, %v1828
          %v1844 = vmax.f32 %v1825, %v1828
          %s1845 = scalar_lea.vmem [#allocation2], %s751
          %1846 = vst [vmem:[%s1845] sm:$0xff] %v1829
          %1847 = vst [vmem:[%s1845 + $0x8] sm:$0xff] %v1830
          %1848 = vst [vmem:[%s1845 + $0x10] sm:$0xff] %v1831
          %1849 = vst [vmem:[%s1845 + $0x18] sm:$0xff] %v1832
          %1850 = vst [vmem:[%s1845 + $0x20] sm:$0xff] %v1833
          %1851 = vst [vmem:[%s1845 + $0x28] sm:$0xff] %v1834
          %1852 = vst [vmem:[%s1845 + $0x30] sm:$0xff] %v1835
          %1853 = vst [vmem:[%s1845 + $0x38] sm:$0xff] %v1836
          %1854 = vst [vmem:[%s1845 + $0x40] sm:$0xff] %v1837
          %1855 = vst [vmem:[%s1845 + $0x48] sm:$0xff] %v1838
          %1856 = vst [vmem:[%s1845 + $0x50] sm:$0xff] %v1839
          %1857 = vst [vmem:[%s1845 + $0x58] sm:$0xff] %v1840
          %1858 = vst [vmem:[%s1845 + $0x60] sm:$0xff] %v1841
          %1859 = vst [vmem:[%s1845 + $0x68] sm:$0xff] %v1842
          %1860 = vst [vmem:[%s1845 + $0x70] sm:$0xff] %v1843
          %1861 = vst [vmem:[%s1845 + $0x78] sm:$0xff] %v1844
          %1862 = vst [vmem:[#allocation16] sm:$0xff] %v1829
          %1863 = vst [vmem:[#allocation16 + $0x8] sm:$0xff] %v1830
          %1864 = vst [vmem:[#allocation16 + $0x10] sm:$0xff] %v1831
          %1865 = vst [vmem:[#allocation16 + $0x18] sm:$0xff] %v1832
          %1866 = vst [vmem:[#allocation16 + $0x20] sm:$0xff] %v1833
          %1867 = vst [vmem:[#allocation16 + $0x28] sm:$0xff] %v1834
          %1868 = vst [vmem:[#allocation16 + $0x30] sm:$0xff] %v1835
          %1869 = vst [vmem:[#allocation16 + $0x38] sm:$0xff] %v1836
          %1870 = vst [vmem:[#allocation16 + $0x40] sm:$0xff] %v1837
          %1871 = vst [vmem:[#allocation16 + $0x48] sm:$0xff] %v1838
          %1872 = vst [vmem:[#allocation16 + $0x50] sm:$0xff] %v1839
          %1873 = vst [vmem:[#allocation16 + $0x58] sm:$0xff] %v1840
          %1874 = vst [vmem:[#allocation16 + $0x60] sm:$0xff] %v1841
          %1875 = vst [vmem:[#allocation16 + $0x68] sm:$0xff] %v1842
          %1876 = vst [vmem:[#allocation16 + $0x70] sm:$0xff] %v1843
          %1877 = vst [vmem:[#allocation16 + $0x78] sm:$0xff] %v1844
        $region64: #{tpu_custom_call.1} parent=31 // pred_fallthru
          _
        // Predicated region
        $region65: #{tpu_custom_call.1} parent=31 // pred_check
          %p1878 = pneg %p132
        $region66: #{tpu_custom_call.1} parent=31 // pred_check_branch
          %1880 = sbr.rel (%p1878) target = $region68
        $region67: #{tpu_custom_call.1} parent=31 // pred_region
          %s1882 = ssub.s32 2048, 2048
          %1883 = vsyncadd [#allocation12], %s1882
          %s1884 = smul.addr %s28, 16
          %s1885 = smul.addr %s1884, 128
          %s1886 = scalar_lea.hbm %s4, %s1885
          %s1887 = sshll.u32 [#allocation16], 4
          %s1888 = int_to_ptr.vmem [resolvable:$true] %s1887
          %1893 = dma.vmem_to_hbm [thread:$0]  %s1888, 2048, %s1886, [#allocation12], 128, 128, 8
        $region68: #{tpu_custom_call.1} parent=31 // pred_fallthru
          _
        // Predicated region
        $region69: #{tpu_custom_call.1} parent=31 // pred_check
          %p1894 = pneg %p132
        $region70: #{tpu_custom_call.1} parent=31 // pred_check_branch
          %1896 = sbr.rel (%p1894) target = $region72
        $region71: #{tpu_custom_call.1} parent=31 // pred_region
          %1897 = dma.done [#allocation12], 2048
        $region72: #{tpu_custom_call.1} parent=31 // pred_fallthru
          _
      $region32: #{tpu_custom_call.1} parent=5 // pred_fallthru
        _
      %p1898 = scmp.le.s32.totalorder 2, %s17
      // Predicated region
      $region73: #{tpu_custom_call.1} parent=5 // pred_check
        %p1899 = pneg %p1898
      $region74: #{tpu_custom_call.1} parent=5 // pred_check_branch
        %1901 = sbr.rel (%p1899) target = $region76
      $region75: #{tpu_custom_call.1} parent=5 // pred_region
        %s1902 = ssub.s32 %s17, 2
      $region76: #{tpu_custom_call.1} parent=5 // pred_fallthru
        _
    $region6: #{tpu_custom_call.1} parent=1 // loop_footer
      %s21 = sadd.s32 1, %s17
    $region7: #{tpu_custom_call.1} parent=1 // loop_footer_branch
      %16 = sbr.rel target = $region3
    $region8: #{tpu_custom_call.1} parent=1 // loop_exit
      _
    %1903 = vsyncpa [#allocation11], 1
    %s1904 = scalar_lea.sflag [#allocation11], 1
    %1905 = vsyncpa %s1904, 1
    %1906 = vsyncpa [#allocation14], 1
    %s1907 = scalar_lea.sflag [#allocation14], 1
    %1908 = vsyncpa %s1907, 1
    %1909 = vsyncpa [#allocation12], 1
    %s1910 = scalar_lea.sflag [#allocation12], 1
    %1911 = vsyncpa %s1910, 1
  %1912 = vsyncmov [#allocation9]
  %s1913 = vpop.sfrf %1912
  %p1914 = scmp.eq.s32.totalorder %s1913, 0
  %p1915 = pneg %p1914
  %1917 = shalt.err (%p1915)

</llo_original>
